<compile_context>
chip_gen: v7x
topology: tpu7x:2x2x1
jax: 0.10.0
libtpu: 0.0.40
codegen_flags: <defaults>
</compile_context>

<pallas_src>
import jax
import jax.numpy as jnp
from jax import lax
from jax.experimental import pallas as pl
from jax.experimental.pallas import tpu as pltpu


def _round_up(x, m):
    return (x + m - 1) // m * m


def attn_pool_kernel(q_ref, keys_ref, klen_ref,
                     wq_ref, wk_ref, wqk_ref, b1_ref,
                     w2_ref, b2_ref, wd_ref, bd_ref,
                     out_ref):
    q = q_ref[...]                                 # (TB, E)
    keys = keys_ref[...]                           # (TB, T, E)
    TB, T, E = keys.shape
    H1 = wq_ref.shape[1]

    # Flatten (batch, time) for the shared-weight DNN matmuls. Minor dim unchanged and
    # T % 8 == 0, so these reshapes are pure tile re-sequencing (no data movement).
    keys_flat = keys.reshape(TB * T, E)
    qk_flat = (q[:, None, :] * keys).reshape(TB * T, E)          # (queries * keys) term

    # Layer 1 of the LocalActivationUnit DNN.  concat([q, k, q-k, q*k]) @ W1^T is folded
    # into three pre-combined projections; the T-invariant query term runs on TB rows only.
    q_proj = jnp.dot(q, wq_ref[...], preferred_element_type=jnp.float32)           # (TB, H1)
    k_proj = jnp.dot(keys_flat, wk_ref[...], preferred_element_type=jnp.float32)   # (TB*T, H1)
    qk_proj = jnp.dot(qk_flat, wqk_ref[...], preferred_element_type=jnp.float32)   # (TB*T, H1)

    pre1 = (k_proj + qk_proj).reshape(TB, T, H1) + q_proj[:, None, :] + b1_ref[...]
    h1 = jax.nn.sigmoid(pre1).reshape(TB * T, H1)

    # Layer 2.
    h2 = jax.nn.sigmoid(
        jnp.dot(h1, w2_ref[...], preferred_element_type=jnp.float32) + b2_ref[...])  # (TB*T, H2)

    # Final dense H2 -> 1 as multiply + lane reduce (avoids a 1-wide MXU matmul).
    score = jnp.sum(h2 * wd_ref[...], axis=-1, keepdims=True) + bd_ref[...]           # (TB*T, 1)

    # Mask invalid positions (weight_normalization=False -> masked scores are 0, so zeroing
    # their contribution to the pooled sum is equivalent), then pool over T.
    weighted = (score * keys_flat).reshape(TB, T, E)
    pos = lax.broadcasted_iota(jnp.int32, (TB, T, E), 1)
    valid = pos < klen_ref[...]                                  # klen block is (TB, 1, 1)
    out_ref[...] = jnp.sum(jnp.where(valid, weighted, 0.0), axis=1).astype(out_ref.dtype)


def prepare_attention_weights(W1, b1, W2, b2, Wd, bd, embedding_dim):
    """One-time conversion of PyTorch-layout LocalActivationUnit weights into kernel layout:
    transposed, query/keys terms pre-combined, hidden dims zero-padded to multiples of 128
    (lane-dense MXU/VPU tiles).  Call once, outside the per-step path."""
    E = embedding_dim
    H1 = W1.shape[0]
    H2 = W2.shape[0]
    H1p = _round_up(H1, 128)
    H2p = _round_up(H2, 128)

    W1t = jnp.asarray(W1, jnp.float32).T                      # (4E, H1)
    wq = W1t[0:E] + W1t[2 * E:3 * E]                          # query + (query-keys) query part
    wk = W1t[E:2 * E] - W1t[2 * E:3 * E]                      # keys  - (query-keys) keys  part
    wqk = W1t[3 * E:4 * E]                                    # (query*keys) part

    wq = jnp.pad(wq, ((0, 0), (0, H1p - H1)))
    wk = jnp.pad(wk, ((0, 0), (0, H1p - H1)))
    wqk = jnp.pad(wqk, ((0, 0), (0, H1p - H1)))
    b1p = jnp.pad(jnp.asarray(b1, jnp.float32), (0, H1p - H1)).reshape(1, 1, H1p)
    # Padded h1 columns evaluate to sigmoid(0)=0.5, but the matching W2 rows are zero so
    # they contribute nothing; same trick for padded h2 columns vs. the zero-padded wd row.
    w2p = jnp.pad(jnp.asarray(W2, jnp.float32).T, ((0, H1p - H1), (0, H2p - H2)))
    b2p = jnp.pad(jnp.asarray(b2, jnp.float32), (0, H2p - H2)).reshape(1, H2p)
    wdp = jnp.pad(jnp.asarray(Wd, jnp.float32).reshape(-1), (0, H2p - H2)).reshape(1, H2p)
    bdp = jnp.asarray(bd, jnp.float32).reshape(1, 1)
    return wq, wk, wqk, b1p, w2p, b2p, wdp, bdp


def attention_sequence_pooling(query, keys, keys_length, prepped_weights, *, batch_tile=8):
    """Forward of AttentionSequencePoolingLayer (default flags).

    query:       (B, 1, E) float
    keys:        (B, T, E) float
    keys_length: (B, 1) int
    prepped_weights: output of prepare_attention_weights(...)
    returns:     (B, 1, E)
    """
    B, T, E = keys.shape
    wq, wk, wqk, b1, w2, b2, wd, bd = prepped_weights
    H1p = wq.shape[1]
    H2p = w2.shape[1]

    TB = batch_tile
    Bp = _round_up(B, TB)
    Tp = _round_up(T, 8)          # keeps in-kernel flatten/unflatten layout-trivial
    assert TB % 8 == 0 or TB == Bp, "batch_tile must be a multiple of 8 (or cover the batch)"

    q2 = jnp.asarray(query, jnp.float32).reshape(B, E)
    keys3 = jnp.asarray(keys, jnp.float32)
    kl = jnp.asarray(keys_length).reshape(B, 1).astype(jnp.int32)
    if Bp != B or Tp != T:
        q2 = jnp.pad(q2, ((0, Bp - B), (0, 0)))
        keys3 = jnp.pad(keys3, ((0, Bp - B), (0, Tp - T), (0, 0)))
        kl = jnp.pad(kl, ((0, Bp - B), (0, 0)))    # padded rows: length 0 -> fully masked
    kl3 = kl.reshape(Bp, 1, 1)

    resident2 = lambda i: (0, 0)        # constant block index -> weights stay VMEM-resident
    resident3 = lambda i: (0, 0, 0)

    out = pl.pallas_call(
        attn_pool_kernel,
        out_shape=jax.ShapeDtypeStruct((Bp, E), jnp.float32),
        grid=(Bp // TB,),
        in_specs=[
            pl.BlockSpec((TB, E), lambda i: (i, 0)),            # query
            pl.BlockSpec((TB, Tp, E), lambda i: (i, 0, 0)),     # keys
            pl.BlockSpec((TB, 1, 1), lambda i: (i, 0, 0)),      # keys_length
            pl.BlockSpec((E, H1p), resident2),                  # Wq
            pl.BlockSpec((E, H1p), resident2),                  # Wk
            pl.BlockSpec((E, H1p), resident2),                  # Wqk
            pl.BlockSpec((1, 1, H1p), resident3),               # b1
            pl.BlockSpec((H1p, H2p), resident2),                # W2
            pl.BlockSpec((1, H2p), resident2),                  # b2
            pl.BlockSpec((1, H2p), resident2),                  # wd (final dense as a row)
            pl.BlockSpec((1, 1), resident2),                    # bd
        ],
        out_specs=pl.BlockSpec((TB, E), lambda i: (i, 0)),
        compiler_params=pltpu.CompilerParams(
            dimension_semantics=("parallel",)),                 # batch tiles are independent
    )(q2, keys3, kl3, wq, wk, wqk, b1, w2, b2, wd, bd)

    return out[:B].reshape(B, 1, E)


def attention_sequence_pooling_ref(query, keys, keys_length, W1, b1, W2, b2, Wd, bd):
    """Pure-JAX reference matching the PyTorch forward (default flags) exactly."""
    B, T, E = keys.shape
    queries = jnp.broadcast_to(query, (B, T, E))
    att_in = jnp.concatenate(
        [queries, keys, queries - keys, queries * keys], axis=-1)          # (B, T, 4E)
    h = jax.nn.sigmoid(att_in @ W1.T + b1)
    h = jax.nn.sigmoid(h @ W2.T + b2)
    score = h @ Wd.T + bd                                                  # (B, T, 1)
    outputs = jnp.swapaxes(score, 1, 2)                                    # (B, 1, T)
    mask = (jnp.arange(T)[None, :] < keys_length.reshape(-1, 1))[:, None, :]
    outputs = jnp.where(mask, outputs, jnp.zeros_like(outputs))
    return jnp.matmul(outputs, keys)                                       # (B, 1, E)


if __name__ == "__main__":
    B, T, E = 16, 16, 4            # embedding_dim=4 (module default); T = behavior length
    H1, H2 = 80, 40                # att_hidden_units=(80, 40) (module default)

    key = jax.random.PRNGKey(0)
    ks = jax.random.split(key, 9)
    W1 = 0.1 * jax.random.normal(ks[0], (H1, 4 * E), jnp.float32)
    b1 = 0.1 * jax.random.normal(ks[1], (H1,), jnp.float32)
    W2 = 0.1 * jax.random.normal(ks[2], (H2, H1), jnp.float32)
    b2 = 0.1 * jax.random.normal(ks[3], (H2,), jnp.float32)
    Wd = 0.1 * jax.random.normal(ks[4], (1, H2), jnp.float32)
    bd = 0.1 * jax.random.normal(ks[5], (1,), jnp.float32)

    query = jax.random.normal(ks[6], (B, 1, E), jnp.float32)
    keys = jax.random.normal(ks[7], (B, T, E), jnp.float32)
    keys_length = jax.random.randint(ks[8], (B, 1), 1, T + 1)

    prepped = prepare_attention_weights(W1, b1, W2, b2, Wd, bd, E)   # one-time weight prep
    out = attention_sequence_pooling(query, keys, keys_length, prepped, batch_tile=8)
    out = jax.block_until_ready(out)

    ref = attention_sequence_pooling_ref(query, keys, keys_length, W1, b1, W2, b2, Wd, bd)

    assert out.shape == (B, 1, E), out.shape
    assert jnp.allclose(out, ref, atol=2e-5, rtol=1e-4), (
        "mismatch vs reference, max abs err = "
        f"{jnp.max(jnp.abs(out - ref))}")

    print("KERNEL_OK")
</pallas_src>

<mosaic_0001>
module attributes {stable_mosaic.version = 11 : i64} {
  func.func @attn_pool_kernel(%arg0: i32, %arg1: memref<8x4xf32, #tpu.memory_space<vmem>>, %arg2: memref<8x16x4xf32, #tpu.memory_space<vmem>>, %arg3: memref<8x1x1xi32, #tpu.memory_space<vmem>>, %arg4: memref<4x128xf32, #tpu.memory_space<vmem>>, %arg5: memref<4x128xf32, #tpu.memory_space<vmem>>, %arg6: memref<4x128xf32, #tpu.memory_space<vmem>>, %arg7: memref<1x1x128xf32, #tpu.memory_space<vmem>>, %arg8: memref<128x128xf32, #tpu.memory_space<vmem>>, %arg9: memref<1x128xf32, #tpu.memory_space<vmem>>, %arg10: memref<1x128xf32, #tpu.memory_space<vmem>>, %arg11: memref<1x1xf32, #tpu.memory_space<vmem>>, %arg12: memref<8x4xf32, #tpu.memory_space<vmem>>) attributes {dimension_semantics = [#tpu.dimension_semantics<parallel>], iteration_bounds = array<i64: 2>, scalar_prefetch = 0 : i64, scratch_operands = 0 : i64, tpu.core_type = #tpu.core_type<tc>, window_params = [{transform_indices = @transform_0, window_bounds = array<i64: 8, 4>}, {transform_indices = @transform_1, window_bounds = array<i64: 8, 16, 4>}, {transform_indices = @transform_2, window_bounds = array<i64: 8, 1, 1>}, {pipeline_mode = #tpu.pipeline_mode<synchronous>, transform_indices = @transform_3, window_bounds = array<i64: 4, 128>}, {pipeline_mode = #tpu.pipeline_mode<synchronous>, transform_indices = @transform_4, window_bounds = array<i64: 4, 128>}, {pipeline_mode = #tpu.pipeline_mode<synchronous>, transform_indices = @transform_5, window_bounds = array<i64: 4, 128>}, {pipeline_mode = #tpu.pipeline_mode<synchronous>, transform_indices = @transform_6, window_bounds = array<i64: 1, 1, 128>}, {pipeline_mode = #tpu.pipeline_mode<synchronous>, transform_indices = @transform_7, window_bounds = array<i64: 128, 128>}, {pipeline_mode = #tpu.pipeline_mode<synchronous>, transform_indices = @transform_8, window_bounds = array<i64: 1, 128>}, {pipeline_mode = #tpu.pipeline_mode<synchronous>, transform_indices = @transform_9, window_bounds = array<i64: 1, 128>}, {pipeline_mode = #tpu.pipeline_mode<synchronous>, transform_indices = @transform_10, window_bounds = array<i64: 1, 1>}, {transform_indices = @transform_11, window_bounds = array<i64: 8, 4>}]} {
    %c0 = arith.constant 0 : index
    %c0_0 = arith.constant 0 : index
    %0 = vector.load %arg1[%c0, %c0_0] : memref<8x4xf32, #tpu.memory_space<vmem>>, vector<8x4xf32>
    %c0_1 = arith.constant 0 : index
    %c0_2 = arith.constant 0 : index
    %c0_3 = arith.constant 0 : index
    %1 = vector.load %arg2[%c0_1, %c0_2, %c0_3] : memref<8x16x4xf32, #tpu.memory_space<vmem>>, vector<8x16x4xf32>
    %2 = vector.shape_cast %1 : vector<8x16x4xf32> to vector<128x4xf32>
    %3 = vector.shape_cast %0 : vector<8x4xf32> to vector<8x1x4xf32>
    %4 = vector.broadcast %3 : vector<8x1x4xf32> to vector<8x16x4xf32>
    %5 = arith.mulf %4, %1 : vector<8x16x4xf32>
    %6 = vector.shape_cast %5 : vector<8x16x4xf32> to vector<128x4xf32>
    %c0_4 = arith.constant 0 : index
    %c0_5 = arith.constant 0 : index
    %7 = vector.load %arg4[%c0_4, %c0_5] : memref<4x128xf32, #tpu.memory_space<vmem>>, vector<4x128xf32>
    %cst = arith.constant dense<0.000000e+00> : vector<8x128xf32>
    %8 = tpu.matmul %0, %7, %cst {dimension_numbers = #tpu.dot_dimension_numbers<[1], [0], [0], [1], [0, 0, 1, 1], [], []>} : vector<8x4xf32>, vector<4x128xf32>, vector<8x128xf32> -> vector<8x128xf32>
    %c0_6 = arith.constant 0 : index
    %c0_7 = arith.constant 0 : index
    %9 = vector.load %arg5[%c0_6, %c0_7] : memref<4x128xf32, #tpu.memory_space<vmem>>, vector<4x128xf32>
    %cst_8 = arith.constant dense<0.000000e+00> : vector<128x128xf32>
    %10 = tpu.matmul %2, %9, %cst_8 {dimension_numbers = #tpu.dot_dimension_numbers<[1], [0], [0], [1], [0, 0, 1, 1], [], []>} : vector<128x4xf32>, vector<4x128xf32>, vector<128x128xf32> -> vector<128x128xf32>
    %c0_9 = arith.constant 0 : index
    %c0_10 = arith.constant 0 : index
    %11 = vector.load %arg6[%c0_9, %c0_10] : memref<4x128xf32, #tpu.memory_space<vmem>>, vector<4x128xf32>
    %cst_11 = arith.constant dense<0.000000e+00> : vector<128x128xf32>
    %12 = tpu.matmul %6, %11, %cst_11 {dimension_numbers = #tpu.dot_dimension_numbers<[1], [0], [0], [1], [0, 0, 1, 1], [], []>} : vector<128x4xf32>, vector<4x128xf32>, vector<128x128xf32> -> vector<128x128xf32>
    %13 = arith.addf %10, %12 : vector<128x128xf32>
    %14 = vector.shape_cast %13 : vector<128x128xf32> to vector<8x16x128xf32>
    %15 = vector.shape_cast %8 : vector<8x128xf32> to vector<8x1x128xf32>
    %16 = vector.broadcast %15 : vector<8x1x128xf32> to vector<8x16x128xf32>
    %17 = arith.addf %14, %16 : vector<8x16x128xf32>
    %c0_12 = arith.constant 0 : index
    %c0_13 = arith.constant 0 : index
    %c0_14 = arith.constant 0 : index
    %18 = vector.load %arg7[%c0_12, %c0_13, %c0_14] : memref<1x1x128xf32, #tpu.memory_space<vmem>>, vector<1x1x128xf32>
    %19 = vector.broadcast %18 : vector<1x1x128xf32> to vector<8x16x128xf32>
    %20 = arith.addf %17, %19 : vector<8x16x128xf32>
    %21 = arith.negf %20 : vector<8x16x128xf32>
    %22 = math.exp %21 : vector<8x16x128xf32>
    %cst_15 = arith.constant 1.000000e+00 : f32
    %23 = vector.broadcast %cst_15 : f32 to vector<8x16x128xf32>
    %24 = arith.addf %23, %22 : vector<8x16x128xf32>
    %25 = arith.divf %23, %24 : vector<8x16x128xf32>
    %26 = vector.shape_cast %25 : vector<8x16x128xf32> to vector<128x128xf32>
    %c0_16 = arith.constant 0 : index
    %c0_17 = arith.constant 0 : index
    %27 = vector.load %arg8[%c0_16, %c0_17] : memref<128x128xf32, #tpu.memory_space<vmem>>, vector<128x128xf32>
    %cst_18 = arith.constant dense<0.000000e+00> : vector<128x128xf32>
    %28 = tpu.matmul %26, %27, %cst_18 {dimension_numbers = #tpu.dot_dimension_numbers<[1], [0], [0], [1], [0, 0, 1, 1], [], []>} : vector<128x128xf32>, vector<128x128xf32>, vector<128x128xf32> -> vector<128x128xf32>
    %c0_19 = arith.constant 0 : index
    %c0_20 = arith.constant 0 : index
    %29 = vector.load %arg9[%c0_19, %c0_20] : memref<1x128xf32, #tpu.memory_space<vmem>>, vector<1x128xf32>
    %30 = vector.broadcast %29 : vector<1x128xf32> to vector<128x128xf32>
    %31 = arith.addf %28, %30 : vector<128x128xf32>
    %32 = arith.negf %31 : vector<128x128xf32>
    %33 = math.exp %32 : vector<128x128xf32>
    %cst_21 = arith.constant 1.000000e+00 : f32
    %34 = vector.broadcast %cst_21 : f32 to vector<128x128xf32>
    %35 = arith.addf %34, %33 : vector<128x128xf32>
    %36 = arith.divf %34, %35 : vector<128x128xf32>
    %c0_22 = arith.constant 0 : index
    %c0_23 = arith.constant 0 : index
    %37 = vector.load %arg10[%c0_22, %c0_23] : memref<1x128xf32, #tpu.memory_space<vmem>>, vector<1x128xf32>
    %38 = vector.broadcast %37 : vector<1x128xf32> to vector<128x128xf32>
    %39 = arith.mulf %36, %38 : vector<128x128xf32>
    %cst_24 = arith.constant dense<0.000000e+00> : vector<128xf32>
    %40 = vector.multi_reduction <add>, %39, %cst_24 [1] : vector<128x128xf32> to vector<128xf32>
    %41 = vector.shape_cast %40 : vector<128xf32> to vector<128x1xf32>
    %c0_25 = arith.constant 0 : index
    %c0_26 = arith.constant 0 : index
    %42 = vector.load %arg11[%c0_25, %c0_26] : memref<1x1xf32, #tpu.memory_space<vmem>>, vector<1x1xf32>
    %43 = vector.broadcast %42 : vector<1x1xf32> to vector<128x1xf32>
    %44 = arith.addf %41, %43 : vector<128x1xf32>
    %45 = vector.broadcast %44 : vector<128x1xf32> to vector<128x4xf32>
    %46 = arith.mulf %45, %2 : vector<128x4xf32>
    %47 = vector.shape_cast %46 : vector<128x4xf32> to vector<8x16x4xf32>
    %48 = tpu.iota {dimensions = array<i32: 1>} : vector<8x16x4xi32>
    %c0_27 = arith.constant 0 : index
    %c0_28 = arith.constant 0 : index
    %c0_29 = arith.constant 0 : index
    %49 = vector.load %arg3[%c0_27, %c0_28, %c0_29] : memref<8x1x1xi32, #tpu.memory_space<vmem>>, vector<8x1x1xi32>
    %50 = vector.broadcast %49 : vector<8x1x1xi32> to vector<8x16x4xi32>
    %51 = arith.cmpi slt, %48, %50 : vector<8x16x4xi32>
    %cst_30 = arith.constant 0.000000e+00 : f32
    %52 = vector.broadcast %cst_30 : f32 to vector<8x16x4xf32>
    %53 = arith.select %51, %47, %52 : vector<8x16x4xi1>, vector<8x16x4xf32>
    %cst_31 = arith.constant dense<0.000000e+00> : vector<8x4xf32>
    %54 = vector.multi_reduction <add>, %53, %cst_31 [1] : vector<8x16x4xf32> to vector<8x4xf32>
    %c0_32 = arith.constant 0 : index
    %c0_33 = arith.constant 0 : index
    %55 = vector.load %arg12[%c0_32, %c0_33] : memref<8x4xf32, #tpu.memory_space<vmem>>, vector<8x4xf32>
    tpu.vector_store %arg12[%c0_32, %c0_33], %54 {strides = array<i32>} : memref<8x4xf32, #tpu.memory_space<vmem>>, vector<8x4xf32>,
    return
  }
  func.func @transform_0(%arg0: i32) -> (i32, i32) {
    %c0_i32 = arith.constant 0 : i32
    %c0_i32_0 = arith.constant 0 : i32
    return %arg0, %c0_i32 : i32, i32
  }
  func.func @transform_1(%arg0: i32) -> (i32, i32, i32) {
    %c0_i32 = arith.constant 0 : i32
    %c0_i32_0 = arith.constant 0 : i32
    %c0_i32_1 = arith.constant 0 : i32
    return %arg0, %c0_i32, %c0_i32_0 : i32, i32, i32
  }
  func.func @transform_2(%arg0: i32) -> (i32, i32, i32) {
    %c0_i32 = arith.constant 0 : i32
    %c0_i32_0 = arith.constant 0 : i32
    %c0_i32_1 = arith.constant 0 : i32
    return %arg0, %c0_i32, %c0_i32_0 : i32, i32, i32
  }
  func.func @transform_3(%arg0: i32) -> (i32, i32) {
    %c0_i32 = arith.constant 0 : i32
    %c0_i32_0 = arith.constant 0 : i32
    %c0_i32_1 = arith.constant 0 : i32
    return %c0_i32, %c0_i32_0 : i32, i32
  }
  func.func @transform_4(%arg0: i32) -> (i32, i32) {
    %c0_i32 = arith.constant 0 : i32
    %c0_i32_0 = arith.constant 0 : i32
    %c0_i32_1 = arith.constant 0 : i32
    return %c0_i32, %c0_i32_0 : i32, i32
  }
  func.func @transform_5(%arg0: i32) -> (i32, i32) {
    %c0_i32 = arith.constant 0 : i32
    %c0_i32_0 = arith.constant 0 : i32
    %c0_i32_1 = arith.constant 0 : i32
    return %c0_i32, %c0_i32_0 : i32, i32
  }
  func.func @transform_6(%arg0: i32) -> (i32, i32, i32) {
    %c0_i32 = arith.constant 0 : i32
    %c0_i32_0 = arith.constant 0 : i32
    %c0_i32_1 = arith.constant 0 : i32
    %c0_i32_2 = arith.constant 0 : i32
    return %c0_i32, %c0_i32_0, %c0_i32_1 : i32, i32, i32
  }
  func.func @transform_7(%arg0: i32) -> (i32, i32) {
    %c0_i32 = arith.constant 0 : i32
    %c0_i32_0 = arith.constant 0 : i32
    %c0_i32_1 = arith.constant 0 : i32
    return %c0_i32, %c0_i32_0 : i32, i32
  }
  func.func @transform_8(%arg0: i32) -> (i32, i32) {
    %c0_i32 = arith.constant 0 : i32
    %c0_i32_0 = arith.constant 0 : i32
    %c0_i32_1 = arith.constant 0 : i32
    return %c0_i32, %c0_i32_0 : i32, i32
  }
  func.func @transform_9(%arg0: i32) -> (i32, i32) {
    %c0_i32 = arith.constant 0 : i32
    %c0_i32_0 = arith.constant 0 : i32
    %c0_i32_1 = arith.constant 0 : i32
    return %c0_i32, %c0_i32_0 : i32, i32
  }
  func.func @transform_10(%arg0: i32) -> (i32, i32) {
    %c0_i32 = arith.constant 0 : i32
    %c0_i32_0 = arith.constant 0 : i32
    %c0_i32_1 = arith.constant 0 : i32
    return %c0_i32, %c0_i32_0 : i32, i32
  }
  func.func @transform_11(%arg0: i32) -> (i32, i32) {
    %c0_i32 = arith.constant 0 : i32
    %c0_i32_0 = arith.constant 0 : i32
    return %arg0, %c0_i32 : i32, i32
  }
}

</mosaic_0001>

<llo_original>
// kernel: tpu_custom_call.1
$region0: #{tpu_custom_call.1}
  #allocation0 [shape = 'u32[]', space=smem, size = 0x4, offset = 0x4, fixed_abs, tag = 'smem constant byte address 0x4 - core index']
  #allocation1 [shape = 'u32[144,128]{1,0:T(1,128)}', space=vmem, size = 0x12000, scoped, tag = 'internal scratch']
  #allocation2 [shape = 'f32[1,1]{1,0:T(1,128)S(1)}', space=vmem, size = 0x200, scoped, tag = 'scoped memory for tpu_custom_call.1']
  %s0 = inlined_call_operand.vmem [shape: f32[16,4], index: 0, kind: input, shape index: {}]
  %s1 = inlined_call_operand.vmem [shape: f32[16,16,4], index: 1, kind: input, shape index: {}]
  %s2 = inlined_call_operand.vmem [shape: s32[16,1,1], index: 2, kind: input, shape index: {}]
  %s3 = inlined_call_operand.vmem [shape: f32[4,128], index: 3, kind: input, shape index: {}]
  %s4 = inlined_call_operand.vmem [shape: f32[4,128], index: 4, kind: input, shape index: {}]
  %s5 = inlined_call_operand.vmem [shape: f32[4,128], index: 5, kind: input, shape index: {}]
  %s6 = inlined_call_operand.vmem [shape: f32[1,1,128], index: 6, kind: input, shape index: {}]
  %s7 = inlined_call_operand.vmem [shape: f32[128,128], index: 7, kind: input, shape index: {}]
  %s8 = inlined_call_operand.vmem [shape: f32[1,128], index: 8, kind: input, shape index: {}]
  %s9 = inlined_call_operand.vmem [shape: f32[1,128], index: 9, kind: input, shape index: {}]
  %s10 = inlined_call_operand.<no memory space> [shape: f32[1,1], index: 10, kind: input, shape index: {}]
  %s11 = inlined_call_operand.vmem [shape: f32[16,4], index: 11, kind: output, shape index: {}]
  %s12 = sld [smem:[#allocation0]]
  $region77: #{tpu_custom_call.1} parent=0
    _
  %s14 = ssub.s32 1, %s12
  %s15 = scalar_select 0, %s14, %s12
  %v16 = vstv %s10
  %17 = vst [vmem:[#allocation2] sm:$0x1] %v16
  loop: start=0, step=1, limit=4
  $region2: #{tpu_custom_call.1} parent=0 // loop_pre_header
    _
  $region3: #{tpu_custom_call.1} parent=0 // loop_header
    %s19 = sphi 0, %s23
    %p20 = scmp.ge.s32.totalorder %s19, 4
    %s29 = sphi 0, %s31
    %s32 = sphi 0, %s29
    %s33 = sphi 0, %s32
    %s49 = sphi 0, %s33
    %s55 = sphi 0, %s57
    %s58 = sphi 0, %s55
    %s59 = sphi 0, %s58
    %s75 = sphi 0, %s59
    %s81 = sphi 0, %s83
    %s84 = sphi 0, %s81
    %s85 = sphi 0, %s84
    %s101 = sphi 0, %s85
    %s105 = sphi 0, %s105
    %s107 = sphi 0, %s105
    %s108 = sphi 0, %s107
    %s122 = sphi 0, %s108
    %s126 = sphi 0, %s126
    %s128 = sphi 0, %s126
    %s129 = sphi 0, %s128
    %s143 = sphi 0, %s129
    %s147 = sphi 0, %s147
    %s149 = sphi 0, %s147
    %s150 = sphi 0, %s149
    %s164 = sphi 0, %s150
    %s168 = sphi 0, %s168
    %s170 = sphi 0, %s168
    %s171 = sphi 0, %s170
    %s185 = sphi 0, %s171
    %s189 = sphi 0, %s189
    %s191 = sphi 0, %s189
    %s192 = sphi 0, %s191
    %s206 = sphi 0, %s192
    %s210 = sphi 0, %s210
    %s212 = sphi 0, %s210
    %s213 = sphi 0, %s212
    %s227 = sphi 0, %s213
    %s231 = sphi 0, %s231
    %s233 = sphi 0, %s231
    %s234 = sphi 0, %s233
    %s248 = sphi 0, %s234
    %s252 = sphi 0, %s252
    %s254 = sphi 0, %s252
    %s255 = sphi 0, %s254
    %s269 = sphi 0, %s255
    %s275 = sphi 0, %s277
    %s278 = sphi 0, %s275
    %s279 = sphi 0, %s278
    %s295 = sphi 0, %s279
  $region4: #{tpu_custom_call.1} parent=0 // loop_header_branch
    %22 = sbr.rel (%p20) target = $region8
  $region5: #{tpu_custom_call.1} parent=0 // loop_body
    %s24 = ssub.s32 %s19, 1
    %s25 = ssub.s32 %s19, 2
    %s26 = sadd.s32 %s19, 1
    %s27 = ssub.s32 %s19, %s26
    %p28 = scmp.eq.s32.totalorder %s27, 0
    %s30 = sadd.s32 %s29, 1
    %s31 = scalar_select %p28, %s29, %s30
    %p34 = pneg %p28
    %p35 = scmp.eq.s32.totalorder %s19, 1
    %p36 = por %p34, %p35
    %p37 = scmp.ne.s32.totalorder %s29, %s32
    %p38 = scmp.eq.s32.totalorder %s19, 0
    %p39 = por %p37, %p38
    %p40 = scmp.ne.s32.totalorder %s29, %s32
    %p41 = scmp.eq.s32.totalorder %s24, 1
    %p42 = por %p40, %p41
    %p43 = scmp.ne.s32.totalorder %s32, %s33
    %p44 = scmp.eq.s32.totalorder %s24, 0
    %p45 = por %p43, %p44
    %p46 = scmp.ne.s32.totalorder %s32, %s33
    %p47 = scmp.eq.s32.totalorder %s25, 1
    %p48 = por %p46, %p47
    %p50 = scmp.ne.s32.totalorder %s33, %s49
    %p51 = scmp.eq.s32.totalorder %s25, 0
    %p52 = por %p50, %p51
    %s53 = ssub.s32 %s19, %s26
    %p54 = scmp.eq.s32.totalorder %s53, 0
    %s56 = sadd.s32 %s55, 1
    %s57 = scalar_select %p54, %s55, %s56
    %p60 = pneg %p54
    %p61 = scmp.eq.s32.totalorder %s19, 1
    %p62 = por %p60, %p61
    %p63 = scmp.ne.s32.totalorder %s55, %s58
    %p64 = scmp.eq.s32.totalorder %s19, 0
    %p65 = por %p63, %p64
    %p66 = scmp.ne.s32.totalorder %s55, %s58
    %p67 = scmp.eq.s32.totalorder %s24, 1
    %p68 = por %p66, %p67
    %p69 = scmp.ne.s32.totalorder %s58, %s59
    %p70 = scmp.eq.s32.totalorder %s24, 0
    %p71 = por %p69, %p70
    %p72 = scmp.ne.s32.totalorder %s58, %s59
    %p73 = scmp.eq.s32.totalorder %s25, 1
    %p74 = por %p72, %p73
    %p76 = scmp.ne.s32.totalorder %s59, %s75
    %p77 = scmp.eq.s32.totalorder %s25, 0
    %p78 = por %p76, %p77
    %s79 = ssub.s32 %s19, %s26
    %p80 = scmp.eq.s32.totalorder %s79, 0
    %s82 = sadd.s32 %s81, 1
    %s83 = scalar_select %p80, %s81, %s82
    %p86 = pneg %p80
    %p87 = scmp.eq.s32.totalorder %s19, 1
    %p88 = por %p86, %p87
    %p89 = scmp.ne.s32.totalorder %s81, %s84
    %p90 = scmp.eq.s32.totalorder %s19, 0
    %p91 = por %p89, %p90
    %p92 = scmp.ne.s32.totalorder %s81, %s84
    %p93 = scmp.eq.s32.totalorder %s24, 1
    %p94 = por %p92, %p93
    %p95 = scmp.ne.s32.totalorder %s84, %s85
    %p96 = scmp.eq.s32.totalorder %s24, 0
    %p97 = por %p95, %p96
    %p98 = scmp.ne.s32.totalorder %s84, %s85
    %p99 = scmp.eq.s32.totalorder %s25, 1
    %p100 = por %p98, %p99
    %p102 = scmp.ne.s32.totalorder %s85, %s101
    %p103 = scmp.eq.s32.totalorder %s25, 0
    %p104 = por %p102, %p103
    %s106 = sadd.s32 %s105, 1
    %p109 = scmp.eq.s32.totalorder %s19, 1
    %p110 = scmp.ne.s32.totalorder %s105, %s107
    %p111 = scmp.eq.s32.totalorder %s19, 0
    %p112 = por %p110, %p111
    %p113 = scmp.ne.s32.totalorder %s105, %s107
    %p114 = scmp.eq.s32.totalorder %s24, 1
    %p115 = por %p113, %p114
    %p116 = scmp.ne.s32.totalorder %s107, %s108
    %p117 = scmp.eq.s32.totalorder %s24, 0
    %p118 = por %p116, %p117
    %p119 = scmp.ne.s32.totalorder %s107, %s108
    %p120 = scmp.eq.s32.totalorder %s25, 1
    %p121 = por %p119, %p120
    %p123 = scmp.ne.s32.totalorder %s108, %s122
    %p124 = scmp.eq.s32.totalorder %s25, 0
    %p125 = por %p123, %p124
    %s127 = sadd.s32 %s126, 1
    %p130 = scmp.eq.s32.totalorder %s19, 1
    %p131 = scmp.ne.s32.totalorder %s126, %s128
    %p132 = scmp.eq.s32.totalorder %s19, 0
    %p133 = por %p131, %p132
    %p134 = scmp.ne.s32.totalorder %s126, %s128
    %p135 = scmp.eq.s32.totalorder %s24, 1
    %p136 = por %p134, %p135
    %p137 = scmp.ne.s32.totalorder %s128, %s129
    %p138 = scmp.eq.s32.totalorder %s24, 0
    %p139 = por %p137, %p138
    %p140 = scmp.ne.s32.totalorder %s128, %s129
    %p141 = scmp.eq.s32.totalorder %s25, 1
    %p142 = por %p140, %p141
    %p144 = scmp.ne.s32.totalorder %s129, %s143
    %p145 = scmp.eq.s32.totalorder %s25, 0
    %p146 = por %p144, %p145
    %s148 = sadd.s32 %s147, 1
    %p151 = scmp.eq.s32.totalorder %s19, 1
    %p152 = scmp.ne.s32.totalorder %s147, %s149
    %p153 = scmp.eq.s32.totalorder %s19, 0
    %p154 = por %p152, %p153
    %p155 = scmp.ne.s32.totalorder %s147, %s149
    %p156 = scmp.eq.s32.totalorder %s24, 1
    %p157 = por %p155, %p156
    %p158 = scmp.ne.s32.totalorder %s149, %s150
    %p159 = scmp.eq.s32.totalorder %s24, 0
    %p160 = por %p158, %p159
    %p161 = scmp.ne.s32.totalorder %s149, %s150
    %p162 = scmp.eq.s32.totalorder %s25, 1
    %p163 = por %p161, %p162
    %p165 = scmp.ne.s32.totalorder %s150, %s164
    %p166 = scmp.eq.s32.totalorder %s25, 0
    %p167 = por %p165, %p166
    %s169 = sadd.s32 %s168, 1
    %p172 = scmp.eq.s32.totalorder %s19, 1
    %p173 = scmp.ne.s32.totalorder %s168, %s170
    %p174 = scmp.eq.s32.totalorder %s19, 0
    %p175 = por %p173, %p174
    %p176 = scmp.ne.s32.totalorder %s168, %s170
    %p177 = scmp.eq.s32.totalorder %s24, 1
    %p178 = por %p176, %p177
    %p179 = scmp.ne.s32.totalorder %s170, %s171
    %p180 = scmp.eq.s32.totalorder %s24, 0
    %p181 = por %p179, %p180
    %p182 = scmp.ne.s32.totalorder %s170, %s171
    %p183 = scmp.eq.s32.totalorder %s25, 1
    %p184 = por %p182, %p183
    %p186 = scmp.ne.s32.totalorder %s171, %s185
    %p187 = scmp.eq.s32.totalorder %s25, 0
    %p188 = por %p186, %p187
    %s190 = sadd.s32 %s189, 1
    %p193 = scmp.eq.s32.totalorder %s19, 1
    %p194 = scmp.ne.s32.totalorder %s189, %s191
    %p195 = scmp.eq.s32.totalorder %s19, 0
    %p196 = por %p194, %p195
    %p197 = scmp.ne.s32.totalorder %s189, %s191
    %p198 = scmp.eq.s32.totalorder %s24, 1
    %p199 = por %p197, %p198
    %p200 = scmp.ne.s32.totalorder %s191, %s192
    %p201 = scmp.eq.s32.totalorder %s24, 0
    %p202 = por %p200, %p201
    %p203 = scmp.ne.s32.totalorder %s191, %s192
    %p204 = scmp.eq.s32.totalorder %s25, 1
    %p205 = por %p203, %p204
    %p207 = scmp.ne.s32.totalorder %s192, %s206
    %p208 = scmp.eq.s32.totalorder %s25, 0
    %p209 = por %p207, %p208
    %s211 = sadd.s32 %s210, 1
    %p214 = scmp.eq.s32.totalorder %s19, 1
    %p215 = scmp.ne.s32.totalorder %s210, %s212
    %p216 = scmp.eq.s32.totalorder %s19, 0
    %p217 = por %p215, %p216
    %p218 = scmp.ne.s32.totalorder %s210, %s212
    %p219 = scmp.eq.s32.totalorder %s24, 1
    %p220 = por %p218, %p219
    %p221 = scmp.ne.s32.totalorder %s212, %s213
    %p222 = scmp.eq.s32.totalorder %s24, 0
    %p223 = por %p221, %p222
    %p224 = scmp.ne.s32.totalorder %s212, %s213
    %p225 = scmp.eq.s32.totalorder %s25, 1
    %p226 = por %p224, %p225
    %p228 = scmp.ne.s32.totalorder %s213, %s227
    %p229 = scmp.eq.s32.totalorder %s25, 0
    %p230 = por %p228, %p229
    %s232 = sadd.s32 %s231, 1
    %p235 = scmp.eq.s32.totalorder %s19, 1
    %p236 = scmp.ne.s32.totalorder %s231, %s233
    %p237 = scmp.eq.s32.totalorder %s19, 0
    %p238 = por %p236, %p237
    %p239 = scmp.ne.s32.totalorder %s231, %s233
    %p240 = scmp.eq.s32.totalorder %s24, 1
    %p241 = por %p239, %p240
    %p242 = scmp.ne.s32.totalorder %s233, %s234
    %p243 = scmp.eq.s32.totalorder %s24, 0
    %p244 = por %p242, %p243
    %p245 = scmp.ne.s32.totalorder %s233, %s234
    %p246 = scmp.eq.s32.totalorder %s25, 1
    %p247 = por %p245, %p246
    %p249 = scmp.ne.s32.totalorder %s234, %s248
    %p250 = scmp.eq.s32.totalorder %s25, 0
    %p251 = por %p249, %p250
    %s253 = sadd.s32 %s252, 1
    %p256 = scmp.eq.s32.totalorder %s19, 1
    %p257 = scmp.ne.s32.totalorder %s252, %s254
    %p258 = scmp.eq.s32.totalorder %s19, 0
    %p259 = por %p257, %p258
    %p260 = scmp.ne.s32.totalorder %s252, %s254
    %p261 = scmp.eq.s32.totalorder %s24, 1
    %p262 = por %p260, %p261
    %p263 = scmp.ne.s32.totalorder %s254, %s255
    %p264 = scmp.eq.s32.totalorder %s24, 0
    %p265 = por %p263, %p264
    %p266 = scmp.ne.s32.totalorder %s254, %s255
    %p267 = scmp.eq.s32.totalorder %s25, 1
    %p268 = por %p266, %p267
    %p270 = scmp.ne.s32.totalorder %s255, %s269
    %p271 = scmp.eq.s32.totalorder %s25, 0
    %p272 = por %p270, %p271
    %s273 = ssub.s32 %s19, %s26
    %p274 = scmp.eq.s32.totalorder %s273, 0
    %s276 = sadd.s32 %s275, 1
    %s277 = scalar_select %p274, %s275, %s276
    %p280 = pneg %p274
    %p281 = scmp.eq.s32.totalorder %s19, 1
    %p282 = por %p280, %p281
    %p283 = scmp.ne.s32.totalorder %s275, %s278
    %p284 = scmp.eq.s32.totalorder %s19, 0
    %p285 = por %p283, %p284
    %p286 = scmp.ne.s32.totalorder %s275, %s278
    %p287 = scmp.eq.s32.totalorder %s24, 1
    %p288 = por %p286, %p287
    %p289 = scmp.ne.s32.totalorder %s278, %s279
    %p290 = scmp.eq.s32.totalorder %s24, 0
    %p291 = por %p289, %p290
    %p292 = scmp.ne.s32.totalorder %s278, %s279
    %p293 = scmp.eq.s32.totalorder %s25, 1
    %p294 = por %p292, %p293
    %p296 = scmp.ne.s32.totalorder %s279, %s295
    %p297 = scmp.eq.s32.totalorder %s25, 0
    %p298 = por %p296, %p297
    %p299 = scmp.le.s32.totalorder 1, %s19
    %p300 = scmp.lt.s32.totalorder %s19, 3
    %p301 = pnand %p299, %p300
    %p302 = pneg %p301
    // Predicated region
    $region9: #{tpu_custom_call.1} parent=5 // pred_check
      _
    $region10: #{tpu_custom_call.1} parent=5 // pred_check_branch
      %304 = sbr.rel (%p301) target = $region12
    $region11: #{tpu_custom_call.1} parent=5 // pred_region
      %s305 = ssub.s32 %s19, 1
      // Predicated region
      $region13: #{tpu_custom_call.1} parent=11 // pred_check
        %p306 = pneg %p118
      $region14: #{tpu_custom_call.1} parent=11 // pred_check_branch
        %308 = sbr.rel (%p306) target = $region16
      $region15: #{tpu_custom_call.1} parent=11 // pred_region
        _
      $region16: #{tpu_custom_call.1} parent=11 // pred_fallthru
        _
      // Predicated region
      $region17: #{tpu_custom_call.1} parent=11 // pred_check
        %p309 = pneg %p139
      $region18: #{tpu_custom_call.1} parent=11 // pred_check_branch
        %311 = sbr.rel (%p309) target = $region20
      $region19: #{tpu_custom_call.1} parent=11 // pred_region
        _
      $region20: #{tpu_custom_call.1} parent=11 // pred_fallthru
        _
      // Predicated region
      $region21: #{tpu_custom_call.1} parent=11 // pred_check
        %p312 = pneg %p160
      $region22: #{tpu_custom_call.1} parent=11 // pred_check_branch
        %314 = sbr.rel (%p312) target = $region24
      $region23: #{tpu_custom_call.1} parent=11 // pred_region
        _
      $region24: #{tpu_custom_call.1} parent=11 // pred_fallthru
        _
      // Predicated region
      $region25: #{tpu_custom_call.1} parent=11 // pred_check
        %p315 = pneg %p181
      $region26: #{tpu_custom_call.1} parent=11 // pred_check_branch
        %317 = sbr.rel (%p315) target = $region28
      $region27: #{tpu_custom_call.1} parent=11 // pred_region
        _
      $region28: #{tpu_custom_call.1} parent=11 // pred_fallthru
        _
      // Predicated region
      $region29: #{tpu_custom_call.1} parent=11 // pred_check
        %p318 = pneg %p202
      $region30: #{tpu_custom_call.1} parent=11 // pred_check_branch
        %320 = sbr.rel (%p318) target = $region32
      $region31: #{tpu_custom_call.1} parent=11 // pred_region
        _
      $region32: #{tpu_custom_call.1} parent=11 // pred_fallthru
        _
      // Predicated region
      $region33: #{tpu_custom_call.1} parent=11 // pred_check
        %p321 = pneg %p223
      $region34: #{tpu_custom_call.1} parent=11 // pred_check_branch
        %323 = sbr.rel (%p321) target = $region36
      $region35: #{tpu_custom_call.1} parent=11 // pred_region
        _
      $region36: #{tpu_custom_call.1} parent=11 // pred_fallthru
        _
      // Predicated region
      $region37: #{tpu_custom_call.1} parent=11 // pred_check
        %p324 = pneg %p244
      $region38: #{tpu_custom_call.1} parent=11 // pred_check_branch
        %326 = sbr.rel (%p324) target = $region40
      $region39: #{tpu_custom_call.1} parent=11 // pred_region
        _
      $region40: #{tpu_custom_call.1} parent=11 // pred_fallthru
        _
      // Predicated region
      $region41: #{tpu_custom_call.1} parent=11 // pred_check
        %p327 = pneg %p265
      $region42: #{tpu_custom_call.1} parent=11 // pred_check_branch
        %329 = sbr.rel (%p327) target = $region44
      $region43: #{tpu_custom_call.1} parent=11 // pred_region
        _
      $region44: #{tpu_custom_call.1} parent=11 // pred_fallthru
        _
    $region12: #{tpu_custom_call.1} parent=5 // pred_fallthru
      _
    %p330 = scmp.lt.s32.totalorder %s19, 2
    // Predicated region
    $region45: #{tpu_custom_call.1} parent=5 // pred_check
      %p331 = pneg %p330
    $region46: #{tpu_custom_call.1} parent=5 // pred_check_branch
      %333 = sbr.rel (%p331) target = $region48
    $region47: #{tpu_custom_call.1} parent=5 // pred_region
      // Predicated region
      $region49: #{tpu_custom_call.1} parent=47 // pred_check
        %p334 = pneg %p39
      $region50: #{tpu_custom_call.1} parent=47 // pred_check_branch
        %336 = sbr.rel (%p334) target = $region52
      $region51: #{tpu_custom_call.1} parent=47 // pred_region
        %p337 = scmp.lt.s32.totalorder %s19, 1
        %s338 = scalar_select %p337, %s19, 1
        %s339 = smul.addr %s338, 8
        %s340 = scalar_lea.vmem %s0, %s339
      $region52: #{tpu_custom_call.1} parent=47 // pred_fallthru
        _
      // Predicated region
      $region53: #{tpu_custom_call.1} parent=47 // pred_check
        %p341 = pneg %p65
      $region54: #{tpu_custom_call.1} parent=47 // pred_check_branch
        %343 = sbr.rel (%p341) target = $region56
      $region55: #{tpu_custom_call.1} parent=47 // pred_region
        %s344 = smul.u32 8, %s19
        %p345 = scmp.lt.s32.totalorder %s344, 15
        %s346 = scalar_select %p345, %s344, 15
        %s347 = smul.addr %s346, 2
        %s348 = smul.addr %s347, 8
        %s349 = scalar_lea.vmem %s1, %s348
        %s350 = smul.u32 8, %s19
      $region56: #{tpu_custom_call.1} parent=47 // pred_fallthru
        _
      // Predicated region
      $region57: #{tpu_custom_call.1} parent=47 // pred_check
        %p351 = pneg %p91
      $region58: #{tpu_custom_call.1} parent=47 // pred_check_branch
        %353 = sbr.rel (%p351) target = $region60
      $region59: #{tpu_custom_call.1} parent=47 // pred_region
        %s354 = smul.u32 8, %s19
        %p355 = scmp.lt.s32.totalorder %s354, 15
        %s356 = scalar_select %p355, %s354, 15
        %s357 = scalar_lea.vmem %s2, %s356
        %s358 = smul.u32 8, %s19
      $region60: #{tpu_custom_call.1} parent=47 // pred_fallthru
        _
    $region48: #{tpu_custom_call.1} parent=5 // pred_fallthru
      _
    %p359 = scmp.le.s32.totalorder 1, %s19
    %p360 = scmp.lt.s32.totalorder %s19, 3
    %p361 = pnand %p359, %p360
    %p362 = pneg %p361
    // Predicated region
    $region61: #{tpu_custom_call.1} parent=5 // pred_check
      _
    $region62: #{tpu_custom_call.1} parent=5 // pred_check_branch
      %364 = sbr.rel (%p361) target = $region64
    $region63: #{tpu_custom_call.1} parent=5 // pred_region
      %s365 = ssub.s32 %s19, 1
      %p366 = scmp.lt.s32.totalorder %s24, 1
      %s367 = scalar_select %p366, %s24, 1
      %s368 = smul.addr %s367, 8
      %s369 = scalar_lea.vmem %s0, %s368
      %p370 = pneg %p45
      %p371 = pneg %p42
      %s372 = smul.u32 8, %s24
      %p373 = scmp.lt.s32.totalorder %s372, 15
      %s374 = scalar_select %p373, %s372, 15
      %s375 = smul.addr %s374, 2
      %s376 = smul.addr %s375, 8
      %s377 = scalar_lea.vmem %s1, %s376
      %p378 = pneg %p71
      %p379 = pneg %p68
      %s380 = smul.u32 8, %s24
      %p381 = scmp.lt.s32.totalorder %s380, 15
      %s382 = scalar_select %p381, %s380, 15
      %s383 = scalar_lea.vmem %s2, %s382
      %p384 = pneg %p97
      %p385 = pneg %p94
      %p386 = pneg %p118
      %p387 = pneg %p115
      %p388 = pneg %p139
      %p389 = pneg %p136
      %p390 = pneg %p160
      %p391 = pneg %p157
      %p392 = pneg %p181
      %p393 = pneg %p178
      %p394 = pneg %p202
      %p395 = pneg %p199
      %p396 = pneg %p223
      %p397 = pneg %p220
      %p398 = pneg %p244
      %p399 = pneg %p241
      %p400 = pneg %p265
      %p401 = pneg %p262
      %p402 = pneg %p291
      %p403 = pneg %p288
      %p404 = scmp.lt.s32.totalorder %s24, 1
      %s405 = scalar_select %p404, %s24, 1
      %s406 = smul.addr %s405, 8
      %s407 = scalar_lea.vmem %s11, %s406
      %p408 = scmp.lt.s32.totalorder %s24, 1
      %s409 = scalar_select %p408, %s24, 1
      %s410 = smul.addr %s409, 8
      %s411 = scalar_lea.vmem %s0, %s410
      %s412 = smul.u32 8, %s24
      %p413 = scmp.lt.s32.totalorder %s412, 15
      %s414 = scalar_select %p413, %s412, 15
      %s415 = smul.addr %s414, 2
      %s416 = smul.addr %s415, 8
      %s417 = scalar_lea.vmem %s1, %s416
      %s418 = smul.u32 8, %s24
      %s419 = smul.u32 8, %s24
      %p420 = scmp.lt.s32.totalorder %s419, 15
      %s421 = scalar_select %p420, %s419, 15
      %s422 = scalar_lea.vmem %s2, %s421
      %s423 = smul.u32 8, %s24
      %p424 = scmp.lt.s32.totalorder %s24, 1
      %s425 = scalar_select %p424, %s24, 1
      %s426 = smul.addr %s425, 8
      %s427 = scalar_lea.vmem %s11, %s426
      %v428 = vld [vmem:[%s411] sm:$0xff]
      %v429 = vld [vmem:[%s417] sm:$0xff]
      %v430 = vld [vmem:[%s417 + $0x8] sm:$0xff]
      %v431 = vld [vmem:[%s417 + $0x10] sm:$0xff]
      %v432 = vld [vmem:[%s417 + $0x18] sm:$0xff]
      %v433 = vld [vmem:[%s417 + $0x20] sm:$0xff]
      %v434 = vld [vmem:[%s417 + $0x28] sm:$0xff]
      %v435 = vld [vmem:[%s417 + $0x30] sm:$0xff]
      %v436 = vld [vmem:[%s417 + $0x38] sm:$0xff]
      %v437 = vld [vmem:[%s417 + $0x40] sm:$0xff]
      %v438 = vld [vmem:[%s417 + $0x48] sm:$0xff]
      %v439 = vld [vmem:[%s417 + $0x50] sm:$0xff]
      %v440 = vld [vmem:[%s417 + $0x58] sm:$0xff]
      %v441 = vld [vmem:[%s417 + $0x60] sm:$0xff]
      %v442 = vld [vmem:[%s417 + $0x68] sm:$0xff]
      %v443 = vld [vmem:[%s417 + $0x70] sm:$0xff]
      %v444 = vld [vmem:[%s417 + $0x78] sm:$0xff]
      %v446 = vcombine.high %v428, %v428
      %v448 = vunpack.c.l.s4 1966171168
      %v449 = vunpack.c.0.s8 %v448
      %v450 = vlaneseq
      %v451 = vshrl.u32 %v450, 7
      %v452 = vsub.s32 %v449, %v451
      %v453 = vrot.slane %v428, %v452
      %v455 = vunpack.c.l.s4 1966171168
      %v456 = vunpack.c.0.s8 %v455
      %v457 = vlaneseq
      %v458 = vshrl.u32 %v457, 7
      %v459 = vsub.s32 %v456, %v458
      %v460 = vrot.slane %v446, %v459
      %v461 = vcombine.high %v453, %v453
      %v462 = vcombine.high %v460, %v460
      %v464 = vunpack.c.l.s4 1966171168
      %v465 = vunpack.c.0.s8 %v464
      %v466 = vlaneseq
      %v467 = vshrl.u32 %v466, 7
      %v468 = vsub.s32 %v465, %v467
      %v469 = vrot.slane %v453, %v468
      %v471 = vunpack.c.l.s4 1966171168
      %v472 = vunpack.c.0.s8 %v471
      %v473 = vlaneseq
      %v474 = vshrl.u32 %v473, 7
      %v475 = vsub.s32 %v472, %v474
      %v476 = vrot.slane %v460, %v475
      %v478 = vunpack.c.l.s4 1966171168
      %v479 = vunpack.c.0.s8 %v478
      %v480 = vlaneseq
      %v481 = vshrl.u32 %v480, 7
      %v482 = vsub.s32 %v479, %v481
      %v483 = vrot.slane %v461, %v482
      %v485 = vunpack.c.l.s4 1966171168
      %v486 = vunpack.c.0.s8 %v485
      %v487 = vlaneseq
      %v488 = vshrl.u32 %v487, 7
      %v489 = vsub.s32 %v486, %v488
      %v490 = vrot.slane %v462, %v489
      %v491 = vcombine.high %v469, %v469
      %v492 = vcombine.high %v476, %v476
      %v493 = vcombine.high %v483, %v483
      %v494 = vcombine.high %v490, %v490
      %v495 = vlaneseq
      %v496 = vshrl.u32 %v495, 7
      %v497 = vsub.s32 0, %v496
      %v498 = vrot.slane %v469, %v497
      %v499 = vlaneseq
      %v500 = vshrl.u32 %v499, 7
      %v501 = vsub.s32 0, %v500
      %v502 = vrot.slane %v483, %v501
      %v503 = vlaneseq
      %v504 = vshrl.u32 %v503, 7
      %v505 = vsub.s32 0, %v504
      %v506 = vrot.slane %v491, %v505
      %v507 = vlaneseq
      %v508 = vshrl.u32 %v507, 7
      %v509 = vsub.s32 0, %v508
      %v510 = vrot.slane %v493, %v509
      %v511 = vlaneseq
      %v512 = vshrl.u32 %v511, 7
      %v513 = vsub.s32 0, %v512
      %v514 = vrot.slane %v476, %v513
      %v515 = vlaneseq
      %v516 = vshrl.u32 %v515, 7
      %v517 = vsub.s32 0, %v516
      %v518 = vrot.slane %v490, %v517
      %v519 = vlaneseq
      %v520 = vshrl.u32 %v519, 7
      %v521 = vsub.s32 0, %v520
      %v522 = vrot.slane %v492, %v521
      %v523 = vlaneseq
      %v524 = vshrl.u32 %v523, 7
      %v525 = vsub.s32 0, %v524
      %v526 = vrot.slane %v494, %v525
      %v535 = vmul.f32 %v498, %v429
      %v536 = vmul.f32 %v498, %v430
      %v537 = vmul.f32 %v502, %v431
      %v538 = vmul.f32 %v502, %v432
      %v539 = vmul.f32 %v506, %v433
      %v540 = vmul.f32 %v506, %v434
      %v541 = vmul.f32 %v510, %v435
      %v542 = vmul.f32 %v510, %v436
      %v543 = vmul.f32 %v514, %v437
      %v544 = vmul.f32 %v514, %v438
      %v545 = vmul.f32 %v518, %v439
      %v546 = vmul.f32 %v518, %v440
      %v547 = vmul.f32 %v522, %v441
      %v548 = vmul.f32 %v522, %v442
      %v549 = vmul.f32 %v526, %v443
      %v550 = vmul.f32 %v526, %v444
      %v551 = vld [vmem:[%s3] sm:$0xf]
      %vm552 = vcmask 31744
      %v553 = vsel %vm552, %v428, 0
      %vm555 = vcmask 1043456
      %v557 = vsel %vm555, %v551, 0
      %559 = vmatprep.subr.mxu0 0.0
      %560 = vmatpush1.msra.mxu0 %v557
      %561 = vmatprep.subr.mxu0 0.0
      %562 = vmatpush1.msra.mxu0 0.0
      %563 = vmatprep.subr.mxu0 0.0
      %564 = vmatpush1.msra.mxu0 0.0
      %565 = vmatprep.subr.mxu0 0.0
      %566 = vmatpush1.msra.mxu0 0.0
      %567 = vmatprep.subr.mxu0 0.0
      %568 = vmatpush1.msra.mxu0 0.0
      %569 = vmatprep.subr.mxu0 0.0
      %570 = vmatpush1.msra.mxu0 0.0
      %571 = vmatprep.subr.mxu0 0.0
      %572 = vmatpush1.msra.mxu0 0.0
      %573 = vmatprep.subr.mxu0 0.0
      %574 = vmatpush1.msra.mxu0 0.0
      %575 = vmatprep.subr.mxu0 0.0
      %576 = vmatpush1.msra.mxu0 0.0
      %577 = vmatprep.subr.mxu0 0.0
      %578 = vmatpush1.msra.mxu0 0.0
      %579 = vmatprep.subr.mxu0 0.0
      %580 = vmatpush1.msra.mxu0 0.0
      %581 = vmatprep.subr.mxu0 0.0
      %582 = vmatpush1.msra.mxu0 0.0
      %583 = vmatprep.subr.mxu0 0.0
      %584 = vmatpush1.msra.mxu0 0.0
      %585 = vmatprep.subr.mxu0 0.0
      %586 = vmatpush1.msra.mxu0 0.0
      %587 = vmatprep.subr.mxu0 0.0
      %588 = vmatpush1.msra.mxu0 0.0
      %589 = vmatprep.subr.mxu0 0.0
      %590 = vmatpush1.msra.mxu0 0.0
      %591 = vmatprep.subr.mxu0 0.0
      %592 = vmatpush1.msra.mxu0 0.0
      %593 = vmatprep.subr.mxu0 0.0
      %594 = vmatpush1.msra.mxu0 0.0
      %595 = vmatprep.subr.mxu0 0.0
      %596 = vmatpush1.msra.mxu0 0.0
      %597 = vmatprep.subr.mxu0 0.0
      %598 = vmatpush1.msra.mxu0 0.0
      %599 = vmatprep.subr.mxu0 0.0
      %600 = vmatpush1.msra.mxu0 0.0
      %601 = vmatprep.subr.mxu0 0.0
      %602 = vmatpush1.msra.mxu0 0.0
      %603 = vmatprep.subr.mxu0 0.0
      %604 = vmatpush1.msra.mxu0 0.0
      %605 = vmatprep.subr.mxu0 0.0
      %606 = vmatpush1.msra.mxu0 0.0
      %607 = vmatprep.subr.mxu0 0.0
      %608 = vmatpush1.msra.mxu0 0.0
      %609 = vmatprep.subr.mxu0 0.0
      %610 = vmatpush1.msra.mxu0 0.0
      %611 = vmatprep.subr.mxu0 0.0
      %612 = vmatpush1.msra.mxu0 0.0
      %613 = vmatprep.subr.mxu0 0.0
      %614 = vmatpush1.msra.mxu0 0.0
      %615 = vmatprep.subr.mxu0 0.0
      %616 = vmatpush1.msra.mxu0 0.0
      %617 = vmatprep.subr.mxu0 0.0
      %618 = vmatpush1.msra.mxu0 0.0
      %619 = vmatprep.subr.mxu0 0.0
      %620 = vmatpush1.msra.mxu0 0.0
      %621 = vmatprep.subr.mxu0 0.0
      %622 = vmatpush1.msra.mxu0 0.0
      %623 = vmatprep.mubr.f32.mxu0 0.0
      %624 = vmatmul.mubr.f32.gmra.mrb[0].mxu0 %v553
      %v625 = vpop.f32.mrb[0].mxu0
      %v626 = vadd.f32 0.0, %v625
      %v627 = vpop.f32.mrb[0].mxu0
      %628 = vdwg.mxu0
      %v629 = vld [vmem:[%s4] sm:$0xf]
      %v630 = vld [vmem:[%s5] sm:$0xf]
      %v632 = vsel %vm552, %v535, 0
      %v635 = vsel %vm552, %v536, 0
      %v638 = vsel %vm552, %v537, 0
      %v641 = vsel %vm552, %v538, 0
      %v644 = vsel %vm552, %v539, 0
      %v647 = vsel %vm552, %v540, 0
      %v650 = vsel %vm552, %v541, 0
      %v653 = vsel %vm552, %v542, 0
      %v656 = vsel %vm552, %v543, 0
      %v659 = vsel %vm552, %v544, 0
      %v662 = vsel %vm552, %v545, 0
      %v665 = vsel %vm552, %v546, 0
      %v668 = vsel %vm552, %v547, 0
      %v671 = vsel %vm552, %v548, 0
      %v674 = vsel %vm552, %v549, 0
      %v677 = vsel %vm552, %v550, 0
      %v680 = vsel %vm555, %v630, 0
      %682 = vmatprep.subr.mxu0 0.0
      %683 = vmatpush1.msra.mxu0 %v680
      %684 = vmatprep.subr.mxu0 0.0
      %685 = vmatpush1.msra.mxu0 0.0
      %686 = vmatprep.subr.mxu0 0.0
      %687 = vmatpush1.msra.mxu0 0.0
      %688 = vmatprep.subr.mxu0 0.0
      %689 = vmatpush1.msra.mxu0 0.0
      %690 = vmatprep.subr.mxu0 0.0
      %691 = vmatpush1.msra.mxu0 0.0
      %692 = vmatprep.subr.mxu0 0.0
      %693 = vmatpush1.msra.mxu0 0.0
      %694 = vmatprep.subr.mxu0 0.0
      %695 = vmatpush1.msra.mxu0 0.0
      %696 = vmatprep.subr.mxu0 0.0
      %697 = vmatpush1.msra.mxu0 0.0
      %698 = vmatprep.subr.mxu0 0.0
      %699 = vmatpush1.msra.mxu0 0.0
      %700 = vmatprep.subr.mxu0 0.0
      %701 = vmatpush1.msra.mxu0 0.0
      %702 = vmatprep.subr.mxu0 0.0
      %703 = vmatpush1.msra.mxu0 0.0
      %704 = vmatprep.subr.mxu0 0.0
      %705 = vmatpush1.msra.mxu0 0.0
      %706 = vmatprep.subr.mxu0 0.0
      %707 = vmatpush1.msra.mxu0 0.0
      %708 = vmatprep.subr.mxu0 0.0
      %709 = vmatpush1.msra.mxu0 0.0
      %710 = vmatprep.subr.mxu0 0.0
      %711 = vmatpush1.msra.mxu0 0.0
      %712 = vmatprep.subr.mxu0 0.0
      %713 = vmatpush1.msra.mxu0 0.0
      %714 = vmatprep.subr.mxu0 0.0
      %715 = vmatpush1.msra.mxu0 0.0
      %716 = vmatprep.subr.mxu0 0.0
      %717 = vmatpush1.msra.mxu0 0.0
      %718 = vmatprep.subr.mxu0 0.0
      %719 = vmatpush1.msra.mxu0 0.0
      %720 = vmatprep.subr.mxu0 0.0
      %721 = vmatpush1.msra.mxu0 0.0
      %722 = vmatprep.subr.mxu0 0.0
      %723 = vmatpush1.msra.mxu0 0.0
      %724 = vmatprep.subr.mxu0 0.0
      %725 = vmatpush1.msra.mxu0 0.0
      %726 = vmatprep.subr.mxu0 0.0
      %727 = vmatpush1.msra.mxu0 0.0
      %728 = vmatprep.subr.mxu0 0.0
      %729 = vmatpush1.msra.mxu0 0.0
      %730 = vmatprep.subr.mxu0 0.0
      %731 = vmatpush1.msra.mxu0 0.0
      %732 = vmatprep.subr.mxu0 0.0
      %733 = vmatpush1.msra.mxu0 0.0
      %734 = vmatprep.subr.mxu0 0.0
      %735 = vmatpush1.msra.mxu0 0.0
      %736 = vmatprep.subr.mxu0 0.0
      %737 = vmatpush1.msra.mxu0 0.0
      %738 = vmatprep.subr.mxu0 0.0
      %739 = vmatpush1.msra.mxu0 0.0
      %740 = vmatprep.subr.mxu0 0.0
      %741 = vmatpush1.msra.mxu0 0.0
      %742 = vmatprep.subr.mxu0 0.0
      %743 = vmatpush1.msra.mxu0 0.0
      %744 = vmatprep.subr.mxu0 0.0
      %745 = vmatpush1.msra.mxu0 0.0
      %746 = vmatprep.mubr.f32.mxu0 0.0
      %747 = vmatmul.mubr.f32.gmra.mrb[0].mxu0 %v632
      %v748 = vpop.f32.mrb[0].mxu0
      %v749 = vadd.f32 0.0, %v748
      %v750 = vpop.f32.mrb[0].mxu0
      %751 = vmatprep.mubr.f32.mxu0 0.0
      %752 = vmatmul.mubr.f32.gmra.mrb[0].mxu0 %v635
      %v753 = vpop.f32.mrb[0].mxu0
      %v754 = vadd.f32 0.0, %v753
      %v755 = vpop.f32.mrb[0].mxu0
      %756 = vmatprep.mubr.f32.mxu0 0.0
      %757 = vmatmul.mubr.f32.gmra.mrb[0].mxu0 %v638
      %v758 = vpop.f32.mrb[0].mxu0
      %v759 = vadd.f32 0.0, %v758
      %v760 = vpop.f32.mrb[0].mxu0
      %761 = vmatprep.mubr.f32.mxu0 0.0
      %762 = vmatmul.mubr.f32.gmra.mrb[0].mxu0 %v641
      %v763 = vpop.f32.mrb[0].mxu0
      %v764 = vadd.f32 0.0, %v763
      %v765 = vpop.f32.mrb[0].mxu0
      %766 = vmatprep.mubr.f32.mxu0 0.0
      %767 = vmatmul.mubr.f32.gmra.mrb[0].mxu0 %v644
      %v768 = vpop.f32.mrb[0].mxu0
      %v769 = vadd.f32 0.0, %v768
      %v770 = vpop.f32.mrb[0].mxu0
      %771 = vmatprep.mubr.f32.mxu0 0.0
      %772 = vmatmul.mubr.f32.gmra.mrb[0].mxu0 %v647
      %v773 = vpop.f32.mrb[0].mxu0
      %v774 = vadd.f32 0.0, %v773
      %v775 = vpop.f32.mrb[0].mxu0
      %776 = vmatprep.mubr.f32.mxu0 0.0
      %777 = vmatmul.mubr.f32.gmra.mrb[0].mxu0 %v650
      %v778 = vpop.f32.mrb[0].mxu0
      %v779 = vadd.f32 0.0, %v778
      %v780 = vpop.f32.mrb[0].mxu0
      %781 = vmatprep.mubr.f32.mxu0 0.0
      %782 = vmatmul.mubr.f32.gmra.mrb[0].mxu0 %v653
      %v783 = vpop.f32.mrb[0].mxu0
      %v784 = vadd.f32 0.0, %v783
      %v785 = vpop.f32.mrb[0].mxu0
      %786 = vmatprep.mubr.f32.mxu0 0.0
      %787 = vmatmul.mubr.f32.gmra.mrb[0].mxu0 %v656
      %v788 = vpop.f32.mrb[0].mxu0
      %v789 = vadd.f32 0.0, %v788
      %v790 = vpop.f32.mrb[0].mxu0
      %791 = vmatprep.mubr.f32.mxu0 0.0
      %792 = vmatmul.mubr.f32.gmra.mrb[0].mxu0 %v659
      %v793 = vpop.f32.mrb[0].mxu0
      %v794 = vadd.f32 0.0, %v793
      %v795 = vpop.f32.mrb[0].mxu0
      %796 = vmatprep.mubr.f32.mxu0 0.0
      %797 = vmatmul.mubr.f32.gmra.mrb[0].mxu0 %v662
      %v798 = vpop.f32.mrb[0].mxu0
      %v799 = vadd.f32 0.0, %v798
      %v800 = vpop.f32.mrb[0].mxu0
      %801 = vmatprep.mubr.f32.mxu0 0.0
      %802 = vmatmul.mubr.f32.gmra.mrb[0].mxu0 %v665
      %v803 = vpop.f32.mrb[0].mxu0
      %v804 = vadd.f32 0.0, %v803
      %v805 = vpop.f32.mrb[0].mxu0
      %806 = vmatprep.mubr.f32.mxu0 0.0
      %807 = vmatmul.mubr.f32.gmra.mrb[0].mxu0 %v668
      %v808 = vpop.f32.mrb[0].mxu0
      %v809 = vadd.f32 0.0, %v808
      %v810 = vpop.f32.mrb[0].mxu0
      %811 = vmatprep.mubr.f32.mxu0 0.0
      %812 = vmatmul.mubr.f32.gmra.mrb[0].mxu0 %v671
      %v813 = vpop.f32.mrb[0].mxu0
      %v814 = vadd.f32 0.0, %v813
      %v815 = vpop.f32.mrb[0].mxu0
      %816 = vmatprep.mubr.f32.mxu0 0.0
      %817 = vmatmul.mubr.f32.gmra.mrb[0].mxu0 %v674
      %v818 = vpop.f32.mrb[0].mxu0
      %v819 = vadd.f32 0.0, %v818
      %v820 = vpop.f32.mrb[0].mxu0
      %821 = vmatprep.mubr.f32.mxu0 0.0
      %822 = vmatmul.mubr.f32.gmra.mrb[0].mxu0 %v677
      %v823 = vpop.f32.mrb[0].mxu0
      %v824 = vadd.f32 0.0, %v823
      %v825 = vpop.f32.mrb[0].mxu0
      %826 = vdwg.mxu0
      %v828 = vsel %vm552, %v429, 0
      %v831 = vsel %vm552, %v430, 0
      %v834 = vsel %vm552, %v431, 0
      %v837 = vsel %vm552, %v432, 0
      %v840 = vsel %vm552, %v433, 0
      %v843 = vsel %vm552, %v434, 0
      %v846 = vsel %vm552, %v435, 0
      %v849 = vsel %vm552, %v436, 0
      %v852 = vsel %vm552, %v437, 0
      %v855 = vsel %vm552, %v438, 0
      %v858 = vsel %vm552, %v439, 0
      %v861 = vsel %vm552, %v440, 0
      %v864 = vsel %vm552, %v441, 0
      %v867 = vsel %vm552, %v442, 0
      %v870 = vsel %vm552, %v443, 0
      %v873 = vsel %vm552, %v444, 0
      %v876 = vsel %vm555, %v629, 0
      %878 = vmatprep.subr.mxu0 0.0
      %879 = vmatpush1.msra.mxu0 %v876
      %880 = vmatprep.subr.mxu0 0.0
      %881 = vmatpush1.msra.mxu0 0.0
      %882 = vmatprep.subr.mxu0 0.0
      %883 = vmatpush1.msra.mxu0 0.0
      %884 = vmatprep.subr.mxu0 0.0
      %885 = vmatpush1.msra.mxu0 0.0
      %886 = vmatprep.subr.mxu0 0.0
      %887 = vmatpush1.msra.mxu0 0.0
      %888 = vmatprep.subr.mxu0 0.0
      %889 = vmatpush1.msra.mxu0 0.0
      %890 = vmatprep.subr.mxu0 0.0
      %891 = vmatpush1.msra.mxu0 0.0
      %892 = vmatprep.subr.mxu0 0.0
      %893 = vmatpush1.msra.mxu0 0.0
      %894 = vmatprep.subr.mxu0 0.0
      %895 = vmatpush1.msra.mxu0 0.0
      %896 = vmatprep.subr.mxu0 0.0
      %897 = vmatpush1.msra.mxu0 0.0
      %898 = vmatprep.subr.mxu0 0.0
      %899 = vmatpush1.msra.mxu0 0.0
      %900 = vmatprep.subr.mxu0 0.0
      %901 = vmatpush1.msra.mxu0 0.0
      %902 = vmatprep.subr.mxu0 0.0
      %903 = vmatpush1.msra.mxu0 0.0
      %904 = vmatprep.subr.mxu0 0.0
      %905 = vmatpush1.msra.mxu0 0.0
      %906 = vmatprep.subr.mxu0 0.0
      %907 = vmatpush1.msra.mxu0 0.0
      %908 = vmatprep.subr.mxu0 0.0
      %909 = vmatpush1.msra.mxu0 0.0
      %910 = vmatprep.subr.mxu0 0.0
      %911 = vmatpush1.msra.mxu0 0.0
      %912 = vmatprep.subr.mxu0 0.0
      %913 = vmatpush1.msra.mxu0 0.0
      %914 = vmatprep.subr.mxu0 0.0
      %915 = vmatpush1.msra.mxu0 0.0
      %916 = vmatprep.subr.mxu0 0.0
      %917 = vmatpush1.msra.mxu0 0.0
      %918 = vmatprep.subr.mxu0 0.0
      %919 = vmatpush1.msra.mxu0 0.0
      %920 = vmatprep.subr.mxu0 0.0
      %921 = vmatpush1.msra.mxu0 0.0
      %922 = vmatprep.subr.mxu0 0.0
      %923 = vmatpush1.msra.mxu0 0.0
      %924 = vmatprep.subr.mxu0 0.0
      %925 = vmatpush1.msra.mxu0 0.0
      %926 = vmatprep.subr.mxu0 0.0
      %927 = vmatpush1.msra.mxu0 0.0
      %928 = vmatprep.subr.mxu0 0.0
      %929 = vmatpush1.msra.mxu0 0.0
      %930 = vmatprep.subr.mxu0 0.0
      %931 = vmatpush1.msra.mxu0 0.0
      %932 = vmatprep.subr.mxu0 0.0
      %933 = vmatpush1.msra.mxu0 0.0
      %934 = vmatprep.subr.mxu0 0.0
      %935 = vmatpush1.msra.mxu0 0.0
      %936 = vmatprep.subr.mxu0 0.0
      %937 = vmatpush1.msra.mxu0 0.0
      %938 = vmatprep.subr.mxu0 0.0
      %939 = vmatpush1.msra.mxu0 0.0
      %940 = vmatprep.subr.mxu0 0.0
      %941 = vmatpush1.msra.mxu0 0.0
      %942 = vmatprep.mubr.f32.mxu0 0.0
      %943 = vmatmul.mubr.f32.gmra.mrb[0].mxu0 %v828
      %v944 = vpop.f32.mrb[0].mxu0
      %v945 = vadd.f32 %v749, %v944
      %v946 = vpop.f32.mrb[0].mxu0
      %947 = vmatprep.mubr.f32.mxu0 0.0
      %948 = vmatmul.mubr.f32.gmra.mrb[0].mxu0 %v831
      %v949 = vpop.f32.mrb[0].mxu0
      %v950 = vadd.f32 %v754, %v949
      %v951 = vpop.f32.mrb[0].mxu0
      %952 = vmatprep.mubr.f32.mxu0 0.0
      %953 = vmatmul.mubr.f32.gmra.mrb[0].mxu0 %v834
      %v954 = vpop.f32.mrb[0].mxu0
      %v955 = vadd.f32 %v759, %v954
      %v956 = vpop.f32.mrb[0].mxu0
      %957 = vmatprep.mubr.f32.mxu0 0.0
      %958 = vmatmul.mubr.f32.gmra.mrb[0].mxu0 %v837
      %v959 = vpop.f32.mrb[0].mxu0
      %v960 = vadd.f32 %v764, %v959
      %v961 = vpop.f32.mrb[0].mxu0
      %962 = vmatprep.mubr.f32.mxu0 0.0
      %963 = vmatmul.mubr.f32.gmra.mrb[0].mxu0 %v840
      %v964 = vpop.f32.mrb[0].mxu0
      %v965 = vadd.f32 %v769, %v964
      %v966 = vpop.f32.mrb[0].mxu0
      %967 = vmatprep.mubr.f32.mxu0 0.0
      %968 = vmatmul.mubr.f32.gmra.mrb[0].mxu0 %v843
      %v969 = vpop.f32.mrb[0].mxu0
      %v970 = vadd.f32 %v774, %v969
      %v971 = vpop.f32.mrb[0].mxu0
      %972 = vmatprep.mubr.f32.mxu0 0.0
      %973 = vmatmul.mubr.f32.gmra.mrb[0].mxu0 %v846
      %v974 = vpop.f32.mrb[0].mxu0
      %v975 = vadd.f32 %v779, %v974
      %v976 = vpop.f32.mrb[0].mxu0
      %977 = vmatprep.mubr.f32.mxu0 0.0
      %978 = vmatmul.mubr.f32.gmra.mrb[0].mxu0 %v849
      %v979 = vpop.f32.mrb[0].mxu0
      %v980 = vadd.f32 %v784, %v979
      %v981 = vpop.f32.mrb[0].mxu0
      %982 = vmatprep.mubr.f32.mxu0 0.0
      %983 = vmatmul.mubr.f32.gmra.mrb[0].mxu0 %v852
      %v984 = vpop.f32.mrb[0].mxu0
      %v985 = vadd.f32 %v789, %v984
      %v986 = vpop.f32.mrb[0].mxu0
      %987 = vmatprep.mubr.f32.mxu0 0.0
      %988 = vmatmul.mubr.f32.gmra.mrb[0].mxu0 %v855
      %v989 = vpop.f32.mrb[0].mxu0
      %v990 = vadd.f32 %v794, %v989
      %v991 = vpop.f32.mrb[0].mxu0
      %992 = vmatprep.mubr.f32.mxu0 0.0
      %993 = vmatmul.mubr.f32.gmra.mrb[0].mxu0 %v858
      %v994 = vpop.f32.mrb[0].mxu0
      %v995 = vadd.f32 %v799, %v994
      %v996 = vpop.f32.mrb[0].mxu0
      %997 = vmatprep.mubr.f32.mxu0 0.0
      %998 = vmatmul.mubr.f32.gmra.mrb[0].mxu0 %v861
      %v999 = vpop.f32.mrb[0].mxu0
      %v1000 = vadd.f32 %v804, %v999
      %v1001 = vpop.f32.mrb[0].mxu0
      %1002 = vmatprep.mubr.f32.mxu0 0.0
      %1003 = vmatmul.mubr.f32.gmra.mrb[0].mxu0 %v864
      %v1004 = vpop.f32.mrb[0].mxu0
      %v1005 = vadd.f32 %v809, %v1004
      %v1006 = vpop.f32.mrb[0].mxu0
      %1007 = vmatprep.mubr.f32.mxu0 0.0
      %1008 = vmatmul.mubr.f32.gmra.mrb[0].mxu0 %v867
      %v1009 = vpop.f32.mrb[0].mxu0
      %v1010 = vadd.f32 %v814, %v1009
      %v1011 = vpop.f32.mrb[0].mxu0
      %1012 = vmatprep.mubr.f32.mxu0 0.0
      %1013 = vmatmul.mubr.f32.gmra.mrb[0].mxu0 %v870
      %v1014 = vpop.f32.mrb[0].mxu0
      %v1015 = vadd.f32 %v819, %v1014
      %v1016 = vpop.f32.mrb[0].mxu0
      %1017 = vmatprep.mubr.f32.mxu0 0.0
      %1018 = vmatmul.mubr.f32.gmra.mrb[0].mxu0 %v873
      %v1019 = vpop.f32.mrb[0].mxu0
      %v1020 = vadd.f32 %v824, %v1019
      %v1021 = vpop.f32.mrb[0].mxu0
      %1022 = vdwg.mxu0
      %v1024 = vcombine.high %v626, %v626
      %v1026 = vunpack.c.l.s4 1966171168
      %v1027 = vunpack.c.0.s8 %v1026
      %v1028 = vlaneseq
      %v1029 = vshrl.u32 %v1028, 7
      %v1030 = vsub.s32 %v1027, %v1029
      %v1031 = vrot.slane %v626, %v1030
      %v1033 = vunpack.c.l.s4 1966171168
      %v1034 = vunpack.c.0.s8 %v1033
      %v1035 = vlaneseq
      %v1036 = vshrl.u32 %v1035, 7
      %v1037 = vsub.s32 %v1034, %v1036
      %v1038 = vrot.slane %v1024, %v1037
      %v1039 = vcombine.high %v1031, %v1031
      %v1040 = vcombine.high %v1038, %v1038
      %v1042 = vunpack.c.l.s4 1966171168
      %v1043 = vunpack.c.0.s8 %v1042
      %v1044 = vlaneseq
      %v1045 = vshrl.u32 %v1044, 7
      %v1046 = vsub.s32 %v1043, %v1045
      %v1047 = vrot.slane %v1031, %v1046
      %v1049 = vunpack.c.l.s4 1966171168
      %v1050 = vunpack.c.0.s8 %v1049
      %v1051 = vlaneseq
      %v1052 = vshrl.u32 %v1051, 7
      %v1053 = vsub.s32 %v1050, %v1052
      %v1054 = vrot.slane %v1038, %v1053
      %v1056 = vunpack.c.l.s4 1966171168
      %v1057 = vunpack.c.0.s8 %v1056
      %v1058 = vlaneseq
      %v1059 = vshrl.u32 %v1058, 7
      %v1060 = vsub.s32 %v1057, %v1059
      %v1061 = vrot.slane %v1039, %v1060
      %v1063 = vunpack.c.l.s4 1966171168
      %v1064 = vunpack.c.0.s8 %v1063
      %v1065 = vlaneseq
      %v1066 = vshrl.u32 %v1065, 7
      %v1067 = vsub.s32 %v1064, %v1066
      %v1068 = vrot.slane %v1040, %v1067
      %v1069 = vcombine.high %v1047, %v1047
      %v1070 = vcombine.high %v1054, %v1054
      %v1071 = vcombine.high %v1061, %v1061
      %v1072 = vcombine.high %v1068, %v1068
      %v1073 = vlaneseq
      %v1074 = vshrl.u32 %v1073, 7
      %v1075 = vsub.s32 0, %v1074
      %v1076 = vrot.slane %v1047, %v1075
      %v1077 = vlaneseq
      %v1078 = vshrl.u32 %v1077, 7
      %v1079 = vsub.s32 0, %v1078
      %v1080 = vrot.slane %v1061, %v1079
      %v1081 = vlaneseq
      %v1082 = vshrl.u32 %v1081, 7
      %v1083 = vsub.s32 0, %v1082
      %v1084 = vrot.slane %v1069, %v1083
      %v1085 = vlaneseq
      %v1086 = vshrl.u32 %v1085, 7
      %v1087 = vsub.s32 0, %v1086
      %v1088 = vrot.slane %v1071, %v1087
      %v1089 = vlaneseq
      %v1090 = vshrl.u32 %v1089, 7
      %v1091 = vsub.s32 0, %v1090
      %v1092 = vrot.slane %v1054, %v1091
      %v1093 = vlaneseq
      %v1094 = vshrl.u32 %v1093, 7
      %v1095 = vsub.s32 0, %v1094
      %v1096 = vrot.slane %v1068, %v1095
      %v1097 = vlaneseq
      %v1098 = vshrl.u32 %v1097, 7
      %v1099 = vsub.s32 0, %v1098
      %v1100 = vrot.slane %v1070, %v1099
      %v1101 = vlaneseq
      %v1102 = vshrl.u32 %v1101, 7
      %v1103 = vsub.s32 0, %v1102
      %v1104 = vrot.slane %v1072, %v1103
      %v1113 = vadd.f32 %v945, %v1076
      %v1114 = vadd.f32 %v950, %v1076
      %v1115 = vadd.f32 %v955, %v1080
      %v1116 = vadd.f32 %v960, %v1080
      %v1117 = vadd.f32 %v965, %v1084
      %v1118 = vadd.f32 %v970, %v1084
      %v1119 = vadd.f32 %v975, %v1088
      %v1120 = vadd.f32 %v980, %v1088
      %v1121 = vadd.f32 %v985, %v1092
      %v1122 = vadd.f32 %v990, %v1092
      %v1123 = vadd.f32 %v995, %v1096
      %v1124 = vadd.f32 %v1000, %v1096
      %v1125 = vadd.f32 %v1005, %v1100
      %v1126 = vadd.f32 %v1010, %v1100
      %v1127 = vadd.f32 %v1015, %v1104
      %v1128 = vadd.f32 %v1020, %v1104
      %v1129 = vld [vmem:[%s6] sm:$0x1]
      %v1131 = vlaneseq
      %v1132 = vshrl.u32 %v1131, 7
      %v1133 = vsub.s32 0, %v1132
      %v1134 = vrot.slane %v1129, %v1133
      %v1136 = vadd.f32 %v1113, %v1134
      %v1137 = vadd.f32 %v1114, %v1134
      %v1138 = vadd.f32 %v1115, %v1134
      %v1139 = vadd.f32 %v1116, %v1134
      %v1140 = vadd.f32 %v1117, %v1134
      %v1141 = vadd.f32 %v1118, %v1134
      %v1142 = vadd.f32 %v1119, %v1134
      %v1143 = vadd.f32 %v1120, %v1134
      %v1144 = vadd.f32 %v1121, %v1134
      %v1145 = vadd.f32 %v1122, %v1134
      %v1146 = vadd.f32 %v1123, %v1134
      %v1147 = vadd.f32 %v1124, %v1134
      %v1148 = vadd.f32 %v1125, %v1134
      %v1149 = vadd.f32 %v1126, %v1134
      %v1150 = vadd.f32 %v1127, %v1134
      %v1151 = vadd.f32 %v1128, %v1134
      %v1152 = vxor.u32 %v1136, 2147483648
      %v1153 = vxor.u32 %v1137, 2147483648
      %v1154 = vxor.u32 %v1138, 2147483648
      %v1155 = vxor.u32 %v1139, 2147483648
      %v1156 = vxor.u32 %v1140, 2147483648
      %v1157 = vxor.u32 %v1141, 2147483648
      %v1158 = vxor.u32 %v1142, 2147483648
      %v1159 = vxor.u32 %v1143, 2147483648
      %v1160 = vxor.u32 %v1144, 2147483648
      %v1161 = vxor.u32 %v1145, 2147483648
      %v1162 = vxor.u32 %v1146, 2147483648
      %v1163 = vxor.u32 %v1147, 2147483648
      %v1164 = vxor.u32 %v1148, 2147483648
      %v1165 = vxor.u32 %v1149, 2147483648
      %v1166 = vxor.u32 %v1150, 2147483648
      %v1167 = vxor.u32 %v1151, 2147483648
      %v1168 = vmul.f32 %v1152, 1.442695
      %v1169 = vpow.pop %v1168
      %v1170 = vmul.f32 %v1153, 1.442695
      %v1171 = vpow.pop %v1170
      %v1172 = vmul.f32 %v1154, 1.442695
      %v1173 = vpow.pop %v1172
      %v1174 = vmul.f32 %v1155, 1.442695
      %v1175 = vpow.pop %v1174
      %v1176 = vmul.f32 %v1156, 1.442695
      %v1177 = vpow.pop %v1176
      %v1178 = vmul.f32 %v1157, 1.442695
      %v1179 = vpow.pop %v1178
      %v1180 = vmul.f32 %v1158, 1.442695
      %v1181 = vpow.pop %v1180
      %v1182 = vmul.f32 %v1159, 1.442695
      %v1183 = vpow.pop %v1182
      %v1184 = vmul.f32 %v1160, 1.442695
      %v1185 = vpow.pop %v1184
      %v1186 = vmul.f32 %v1161, 1.442695
      %v1187 = vpow.pop %v1186
      %v1188 = vmul.f32 %v1162, 1.442695
      %v1189 = vpow.pop %v1188
      %v1190 = vmul.f32 %v1163, 1.442695
      %v1191 = vpow.pop %v1190
      %v1192 = vmul.f32 %v1164, 1.442695
      %v1193 = vpow.pop %v1192
      %v1194 = vmul.f32 %v1165, 1.442695
      %v1195 = vpow.pop %v1194
      %v1196 = vmul.f32 %v1166, 1.442695
      %v1197 = vpow.pop %v1196
      %v1198 = vmul.f32 %v1167, 1.442695
      %v1199 = vpow.pop %v1198
      %v1200 = vadd.f32 %v1169, 1.0
      %v1201 = vadd.f32 %v1171, 1.0
      %v1202 = vadd.f32 %v1173, 1.0
      %v1203 = vadd.f32 %v1175, 1.0
      %v1204 = vadd.f32 %v1177, 1.0
      %v1205 = vadd.f32 %v1179, 1.0
      %v1206 = vadd.f32 %v1181, 1.0
      %v1207 = vadd.f32 %v1183, 1.0
      %v1208 = vadd.f32 %v1185, 1.0
      %v1209 = vadd.f32 %v1187, 1.0
      %v1210 = vadd.f32 %v1189, 1.0
      %v1211 = vadd.f32 %v1191, 1.0
      %v1212 = vadd.f32 %v1193, 1.0
      %v1213 = vadd.f32 %v1195, 1.0
      %v1214 = vadd.f32 %v1197, 1.0
      %v1215 = vadd.f32 %v1199, 1.0
      %v1216 = vrcp.pop %v1200
      %v1217 = vmul.f32 1.0, %v1216
      %v1218 = vrcp.pop %v1201
      %v1219 = vmul.f32 1.0, %v1218
      %v1220 = vrcp.pop %v1202
      %v1221 = vmul.f32 1.0, %v1220
      %v1222 = vrcp.pop %v1203
      %v1223 = vmul.f32 1.0, %v1222
      %v1224 = vrcp.pop %v1204
      %v1225 = vmul.f32 1.0, %v1224
      %v1226 = vrcp.pop %v1205
      %v1227 = vmul.f32 1.0, %v1226
      %v1228 = vrcp.pop %v1206
      %v1229 = vmul.f32 1.0, %v1228
      %v1230 = vrcp.pop %v1207
      %v1231 = vmul.f32 1.0, %v1230
      %v1232 = vrcp.pop %v1208
      %v1233 = vmul.f32 1.0, %v1232
      %v1234 = vrcp.pop %v1209
      %v1235 = vmul.f32 1.0, %v1234
      %v1236 = vrcp.pop %v1210
      %v1237 = vmul.f32 1.0, %v1236
      %v1238 = vrcp.pop %v1211
      %v1239 = vmul.f32 1.0, %v1238
      %v1240 = vrcp.pop %v1212
      %v1241 = vmul.f32 1.0, %v1240
      %v1242 = vrcp.pop %v1213
      %v1243 = vmul.f32 1.0, %v1242
      %v1244 = vrcp.pop %v1214
      %v1245 = vmul.f32 1.0, %v1244
      %v1246 = vrcp.pop %v1215
      %v1247 = vmul.f32 1.0, %v1246
      %v1248 = vld [vmem:[%s7] sm:$0xff]
      %v1249 = vld [vmem:[%s7 + $0x8] sm:$0xff]
      %v1250 = vld [vmem:[%s7 + $0x10] sm:$0xff]
      %v1251 = vld [vmem:[%s7 + $0x18] sm:$0xff]
      %v1252 = vld [vmem:[%s7 + $0x20] sm:$0xff]
      %v1253 = vld [vmem:[%s7 + $0x28] sm:$0xff]
      %v1254 = vld [vmem:[%s7 + $0x30] sm:$0xff]
      %v1255 = vld [vmem:[%s7 + $0x38] sm:$0xff]
      %v1256 = vld [vmem:[%s7 + $0x40] sm:$0xff]
      %v1257 = vld [vmem:[%s7 + $0x48] sm:$0xff]
      %v1258 = vld [vmem:[%s7 + $0x50] sm:$0xff]
      %v1259 = vld [vmem:[%s7 + $0x58] sm:$0xff]
      %v1260 = vld [vmem:[%s7 + $0x60] sm:$0xff]
      %v1261 = vld [vmem:[%s7 + $0x68] sm:$0xff]
      %v1262 = vld [vmem:[%s7 + $0x70] sm:$0xff]
      %v1263 = vld [vmem:[%s7 + $0x78] sm:$0xff]
      %v1264 = vld [vmem:[%s8] sm:$0x1]
      %v1266 = vlaneseq
      %v1267 = vshrl.u32 %v1266, 7
      %v1268 = vsub.s32 0, %v1267
      %v1269 = vrot.slane %v1264, %v1268
      %1271 = vmatprep.subr.mxu0 0.0
      %1272 = vmatpush1.msra.mxu0 %v1248
      %1273 = vmatprep.subr.mxu0 0.0
      %1274 = vmatpush1.msra.mxu0 %v1249
      %1275 = vmatprep.subr.mxu0 0.0
      %1276 = vmatpush1.msra.mxu0 %v1250
      %1277 = vmatprep.subr.mxu0 0.0
      %1278 = vmatpush1.msra.mxu0 %v1251
      %1279 = vmatprep.subr.mxu0 0.0
      %1280 = vmatpush1.msra.mxu0 %v1252
      %1281 = vmatprep.subr.mxu0 0.0
      %1282 = vmatpush1.msra.mxu0 %v1253
      %1283 = vmatprep.subr.mxu0 0.0
      %1284 = vmatpush1.msra.mxu0 %v1254
      %1285 = vmatprep.subr.mxu0 0.0
      %1286 = vmatpush1.msra.mxu0 %v1255
      %1287 = vmatprep.subr.mxu0 0.0
      %1288 = vmatpush1.msra.mxu0 %v1256
      %1289 = vmatprep.subr.mxu0 0.0
      %1290 = vmatpush1.msra.mxu0 %v1257
      %1291 = vmatprep.subr.mxu0 0.0
      %1292 = vmatpush1.msra.mxu0 %v1258
      %1293 = vmatprep.subr.mxu0 0.0
      %1294 = vmatpush1.msra.mxu0 %v1259
      %1295 = vmatprep.subr.mxu0 0.0
      %1296 = vmatpush1.msra.mxu0 %v1260
      %1297 = vmatprep.subr.mxu0 0.0
      %1298 = vmatpush1.msra.mxu0 %v1261
      %1299 = vmatprep.subr.mxu0 0.0
      %1300 = vmatpush1.msra.mxu0 %v1262
      %1301 = vmatprep.subr.mxu0 0.0
      %1302 = vmatpush1.msra.mxu0 %v1263
      %1303 = vmatprep.subr.mxu0 0.0
      %1304 = vmatpush1.msra.mxu0 0.0
      %1305 = vmatprep.subr.mxu0 0.0
      %1306 = vmatpush1.msra.mxu0 0.0
      %1307 = vmatprep.subr.mxu0 0.0
      %1308 = vmatpush1.msra.mxu0 0.0
      %1309 = vmatprep.subr.mxu0 0.0
      %1310 = vmatpush1.msra.mxu0 0.0
      %1311 = vmatprep.subr.mxu0 0.0
      %1312 = vmatpush1.msra.mxu0 0.0
      %1313 = vmatprep.subr.mxu0 0.0
      %1314 = vmatpush1.msra.mxu0 0.0
      %1315 = vmatprep.subr.mxu0 0.0
      %1316 = vmatpush1.msra.mxu0 0.0
      %1317 = vmatprep.subr.mxu0 0.0
      %1318 = vmatpush1.msra.mxu0 0.0
      %1319 = vmatprep.subr.mxu0 0.0
      %1320 = vmatpush1.msra.mxu0 0.0
      %1321 = vmatprep.subr.mxu0 0.0
      %1322 = vmatpush1.msra.mxu0 0.0
      %1323 = vmatprep.subr.mxu0 0.0
      %1324 = vmatpush1.msra.mxu0 0.0
      %1325 = vmatprep.subr.mxu0 0.0
      %1326 = vmatpush1.msra.mxu0 0.0
      %1327 = vmatprep.subr.mxu0 0.0
      %1328 = vmatpush1.msra.mxu0 0.0
      %1329 = vmatprep.subr.mxu0 0.0
      %1330 = vmatpush1.msra.mxu0 0.0
      %1331 = vmatprep.subr.mxu0 0.0
      %1332 = vmatpush1.msra.mxu0 0.0
      %1333 = vmatprep.subr.mxu0 0.0
      %1334 = vmatpush1.msra.mxu0 0.0
      %1335 = vmatprep.mubr.f32.mxu0 0.0
      %1336 = vmatmul.mubr.f32.gmra.mrb[0].mxu0 %v1217
      %v1337 = vpop.f32.mrb[0].mxu0
      %v1338 = vadd.f32 %v1269, %v1337
      %v1339 = vpop.f32.mrb[0].mxu0
      %1340 = vmatprep.mubr.f32.mxu0 0.0
      %1341 = vmatmul.mubr.f32.gmra.mrb[0].mxu0 %v1219
      %v1342 = vpop.f32.mrb[0].mxu0
      %v1343 = vadd.f32 %v1269, %v1342
      %v1344 = vpop.f32.mrb[0].mxu0
      %1345 = vmatprep.mubr.f32.mxu0 0.0
      %1346 = vmatmul.mubr.f32.gmra.mrb[0].mxu0 %v1221
      %v1347 = vpop.f32.mrb[0].mxu0
      %v1348 = vadd.f32 %v1269, %v1347
      %v1349 = vpop.f32.mrb[0].mxu0
      %1350 = vmatprep.mubr.f32.mxu0 0.0
      %1351 = vmatmul.mubr.f32.gmra.mrb[0].mxu0 %v1223
      %v1352 = vpop.f32.mrb[0].mxu0
      %v1353 = vadd.f32 %v1269, %v1352
      %v1354 = vpop.f32.mrb[0].mxu0
      %1355 = vmatprep.mubr.f32.mxu0 0.0
      %1356 = vmatmul.mubr.f32.gmra.mrb[0].mxu0 %v1225
      %v1357 = vpop.f32.mrb[0].mxu0
      %v1358 = vadd.f32 %v1269, %v1357
      %v1359 = vpop.f32.mrb[0].mxu0
      %1360 = vmatprep.mubr.f32.mxu0 0.0
      %1361 = vmatmul.mubr.f32.gmra.mrb[0].mxu0 %v1227
      %v1362 = vpop.f32.mrb[0].mxu0
      %v1363 = vadd.f32 %v1269, %v1362
      %v1364 = vpop.f32.mrb[0].mxu0
      %1365 = vmatprep.mubr.f32.mxu0 0.0
      %1366 = vmatmul.mubr.f32.gmra.mrb[0].mxu0 %v1229
      %v1367 = vpop.f32.mrb[0].mxu0
      %v1368 = vadd.f32 %v1269, %v1367
      %v1369 = vpop.f32.mrb[0].mxu0
      %1370 = vmatprep.mubr.f32.mxu0 0.0
      %1371 = vmatmul.mubr.f32.gmra.mrb[0].mxu0 %v1231
      %v1372 = vpop.f32.mrb[0].mxu0
      %v1373 = vadd.f32 %v1269, %v1372
      %v1374 = vpop.f32.mrb[0].mxu0
      %1375 = vmatprep.mubr.f32.mxu0 0.0
      %1376 = vmatmul.mubr.f32.gmra.mrb[0].mxu0 %v1233
      %v1377 = vpop.f32.mrb[0].mxu0
      %v1378 = vadd.f32 %v1269, %v1377
      %v1379 = vpop.f32.mrb[0].mxu0
      %1380 = vmatprep.mubr.f32.mxu0 0.0
      %1381 = vmatmul.mubr.f32.gmra.mrb[0].mxu0 %v1235
      %v1382 = vpop.f32.mrb[0].mxu0
      %v1383 = vadd.f32 %v1269, %v1382
      %v1384 = vpop.f32.mrb[0].mxu0
      %1385 = vmatprep.mubr.f32.mxu0 0.0
      %1386 = vmatmul.mubr.f32.gmra.mrb[0].mxu0 %v1237
      %v1387 = vpop.f32.mrb[0].mxu0
      %v1388 = vadd.f32 %v1269, %v1387
      %v1389 = vpop.f32.mrb[0].mxu0
      %1390 = vmatprep.mubr.f32.mxu0 0.0
      %1391 = vmatmul.mubr.f32.gmra.mrb[0].mxu0 %v1239
      %v1392 = vpop.f32.mrb[0].mxu0
      %v1393 = vadd.f32 %v1269, %v1392
      %v1394 = vpop.f32.mrb[0].mxu0
      %1395 = vmatprep.mubr.f32.mxu0 0.0
      %1396 = vmatmul.mubr.f32.gmra.mrb[0].mxu0 %v1241
      %v1397 = vpop.f32.mrb[0].mxu0
      %v1398 = vadd.f32 %v1269, %v1397
      %v1399 = vpop.f32.mrb[0].mxu0
      %1400 = vmatprep.mubr.f32.mxu0 0.0
      %1401 = vmatmul.mubr.f32.gmra.mrb[0].mxu0 %v1243
      %v1402 = vpop.f32.mrb[0].mxu0
      %v1403 = vadd.f32 %v1269, %v1402
      %v1404 = vpop.f32.mrb[0].mxu0
      %1405 = vmatprep.mubr.f32.mxu0 0.0
      %1406 = vmatmul.mubr.f32.gmra.mrb[0].mxu0 %v1245
      %v1407 = vpop.f32.mrb[0].mxu0
      %v1408 = vadd.f32 %v1269, %v1407
      %v1409 = vpop.f32.mrb[0].mxu0
      %1410 = vmatprep.mubr.f32.mxu0 0.0
      %1411 = vmatmul.mubr.f32.gmra.mrb[0].mxu0 %v1247
      %v1412 = vpop.f32.mrb[0].mxu0
      %v1413 = vadd.f32 %v1269, %v1412
      %v1414 = vpop.f32.mrb[0].mxu0
      %1415 = vdwg.mxu0
      %v1416 = vxor.u32 %v1338, 2147483648
      %v1417 = vxor.u32 %v1343, 2147483648
      %v1418 = vxor.u32 %v1348, 2147483648
      %v1419 = vxor.u32 %v1353, 2147483648
      %v1420 = vxor.u32 %v1358, 2147483648
      %v1421 = vxor.u32 %v1363, 2147483648
      %v1422 = vxor.u32 %v1368, 2147483648
      %v1423 = vxor.u32 %v1373, 2147483648
      %v1424 = vxor.u32 %v1378, 2147483648
      %v1425 = vxor.u32 %v1383, 2147483648
      %v1426 = vxor.u32 %v1388, 2147483648
      %v1427 = vxor.u32 %v1393, 2147483648
      %v1428 = vxor.u32 %v1398, 2147483648
      %v1429 = vxor.u32 %v1403, 2147483648
      %v1430 = vxor.u32 %v1408, 2147483648
      %v1431 = vxor.u32 %v1413, 2147483648
      %v1432 = vmul.f32 %v1416, 1.442695
      %v1433 = vpow.pop %v1432
      %v1434 = vmul.f32 %v1417, 1.442695
      %v1435 = vpow.pop %v1434
      %v1436 = vmul.f32 %v1418, 1.442695
      %v1437 = vpow.pop %v1436
      %v1438 = vmul.f32 %v1419, 1.442695
      %v1439 = vpow.pop %v1438
      %v1440 = vmul.f32 %v1420, 1.442695
      %v1441 = vpow.pop %v1440
      %v1442 = vmul.f32 %v1421, 1.442695
      %v1443 = vpow.pop %v1442
      %v1444 = vmul.f32 %v1422, 1.442695
      %v1445 = vpow.pop %v1444
      %v1446 = vmul.f32 %v1423, 1.442695
      %v1447 = vpow.pop %v1446
      %v1448 = vmul.f32 %v1424, 1.442695
      %v1449 = vpow.pop %v1448
      %v1450 = vmul.f32 %v1425, 1.442695
      %v1451 = vpow.pop %v1450
      %v1452 = vmul.f32 %v1426, 1.442695
      %v1453 = vpow.pop %v1452
      %v1454 = vmul.f32 %v1427, 1.442695
      %v1455 = vpow.pop %v1454
      %v1456 = vmul.f32 %v1428, 1.442695
      %v1457 = vpow.pop %v1456
      %v1458 = vmul.f32 %v1429, 1.442695
      %v1459 = vpow.pop %v1458
      %v1460 = vmul.f32 %v1430, 1.442695
      %v1461 = vpow.pop %v1460
      %v1462 = vmul.f32 %v1431, 1.442695
      %v1463 = vpow.pop %v1462
      %v1464 = vadd.f32 %v1433, 1.0
      %v1465 = vadd.f32 %v1435, 1.0
      %v1466 = vadd.f32 %v1437, 1.0
      %v1467 = vadd.f32 %v1439, 1.0
      %v1468 = vadd.f32 %v1441, 1.0
      %v1469 = vadd.f32 %v1443, 1.0
      %v1470 = vadd.f32 %v1445, 1.0
      %v1471 = vadd.f32 %v1447, 1.0
      %v1472 = vadd.f32 %v1449, 1.0
      %v1473 = vadd.f32 %v1451, 1.0
      %v1474 = vadd.f32 %v1453, 1.0
      %v1475 = vadd.f32 %v1455, 1.0
      %v1476 = vadd.f32 %v1457, 1.0
      %v1477 = vadd.f32 %v1459, 1.0
      %v1478 = vadd.f32 %v1461, 1.0
      %v1479 = vadd.f32 %v1463, 1.0
      %v1480 = vrcp.pop %v1464
      %v1481 = vmul.f32 1.0, %v1480
      %v1482 = vrcp.pop %v1465
      %v1483 = vmul.f32 1.0, %v1482
      %v1484 = vrcp.pop %v1466
      %v1485 = vmul.f32 1.0, %v1484
      %v1486 = vrcp.pop %v1467
      %v1487 = vmul.f32 1.0, %v1486
      %v1488 = vrcp.pop %v1468
      %v1489 = vmul.f32 1.0, %v1488
      %v1490 = vrcp.pop %v1469
      %v1491 = vmul.f32 1.0, %v1490
      %v1492 = vrcp.pop %v1470
      %v1493 = vmul.f32 1.0, %v1492
      %v1494 = vrcp.pop %v1471
      %v1495 = vmul.f32 1.0, %v1494
      %v1496 = vrcp.pop %v1472
      %v1497 = vmul.f32 1.0, %v1496
      %v1498 = vrcp.pop %v1473
      %v1499 = vmul.f32 1.0, %v1498
      %v1500 = vrcp.pop %v1474
      %v1501 = vmul.f32 1.0, %v1500
      %v1502 = vrcp.pop %v1475
      %v1503 = vmul.f32 1.0, %v1502
      %v1504 = vrcp.pop %v1476
      %v1505 = vmul.f32 1.0, %v1504
      %v1506 = vrcp.pop %v1477
      %v1507 = vmul.f32 1.0, %v1506
      %v1508 = vrcp.pop %v1478
      %v1509 = vmul.f32 1.0, %v1508
      %v1510 = vrcp.pop %v1479
      %v1511 = vmul.f32 1.0, %v1510
      %v1512 = vld [vmem:[%s9] sm:$0x1]
      %v1514 = vlaneseq
      %v1515 = vshrl.u32 %v1514, 7
      %v1516 = vsub.s32 0, %v1515
      %v1517 = vrot.slane %v1512, %v1516
      %v1519 = vmul.f32 %v1481, %v1517
      %v1520 = vmul.f32 %v1483, %v1517
      %v1521 = vmul.f32 %v1485, %v1517
      %v1522 = vmul.f32 %v1487, %v1517
      %v1523 = vmul.f32 %v1489, %v1517
      %v1524 = vmul.f32 %v1491, %v1517
      %v1525 = vmul.f32 %v1493, %v1517
      %v1526 = vmul.f32 %v1495, %v1517
      %v1527 = vmul.f32 %v1497, %v1517
      %v1528 = vmul.f32 %v1499, %v1517
      %v1529 = vmul.f32 %v1501, %v1517
      %v1530 = vmul.f32 %v1503, %v1517
      %v1531 = vmul.f32 %v1505, %v1517
      %v1532 = vmul.f32 %v1507, %v1517
      %v1533 = vmul.f32 %v1509, %v1517
      %v1534 = vmul.f32 %v1511, %v1517
      %1535 = vadd.xlane.f32.xlu0 %v1519
      %v1536 = vpop.xlane.xlu0 %1535
      %1537 = vadd.xlane.f32.xlu0 %v1520
      %v1538 = vpop.xlane.xlu0 %1537
      %1539 = vadd.xlane.f32.xlu0 %v1521
      %v1540 = vpop.xlane.xlu0 %1539
      %1541 = vadd.xlane.f32.xlu0 %v1522
      %v1542 = vpop.xlane.xlu0 %1541
      %1543 = vadd.xlane.f32.xlu0 %v1523
      %v1544 = vpop.xlane.xlu0 %1543
      %1545 = vadd.xlane.f32.xlu0 %v1524
      %v1546 = vpop.xlane.xlu0 %1545
      %1547 = vadd.xlane.f32.xlu0 %v1525
      %v1548 = vpop.xlane.xlu0 %1547
      %1549 = vadd.xlane.f32.xlu0 %v1526
      %v1550 = vpop.xlane.xlu0 %1549
      %1551 = vadd.xlane.f32.xlu0 %v1527
      %v1552 = vpop.xlane.xlu0 %1551
      %1553 = vadd.xlane.f32.xlu0 %v1528
      %v1554 = vpop.xlane.xlu0 %1553
      %1555 = vadd.xlane.f32.xlu0 %v1529
      %v1556 = vpop.xlane.xlu0 %1555
      %1557 = vadd.xlane.f32.xlu0 %v1530
      %v1558 = vpop.xlane.xlu0 %1557
      %1559 = vadd.xlane.f32.xlu0 %v1531
      %v1560 = vpop.xlane.xlu0 %1559
      %1561 = vadd.xlane.f32.xlu0 %v1532
      %v1562 = vpop.xlane.xlu0 %1561
      %1563 = vadd.xlane.f32.xlu0 %v1533
      %v1564 = vpop.xlane.xlu0 %1563
      %1565 = vadd.xlane.f32.xlu0 %v1534
      %v1566 = vpop.xlane.xlu0 %1565
      %v1567 = vld [vmem:[#allocation2] sm:$0x1]
      %v1569 = vlaneseq
      %v1570 = vshrl.u32 %v1569, 7
      %v1571 = vsub.s32 0, %v1570
      %v1572 = vrot.slane %v1567, %v1571
      %v1574 = vadd.f32 %v1536, %v1572
      %v1575 = vadd.f32 %v1538, %v1572
      %v1576 = vadd.f32 %v1540, %v1572
      %v1577 = vadd.f32 %v1542, %v1572
      %v1578 = vadd.f32 %v1544, %v1572
      %v1579 = vadd.f32 %v1546, %v1572
      %v1580 = vadd.f32 %v1548, %v1572
      %v1581 = vadd.f32 %v1550, %v1572
      %v1582 = vadd.f32 %v1552, %v1572
      %v1583 = vadd.f32 %v1554, %v1572
      %v1584 = vadd.f32 %v1556, %v1572
      %v1585 = vadd.f32 %v1558, %v1572
      %v1586 = vadd.f32 %v1560, %v1572
      %v1587 = vadd.f32 %v1562, %v1572
      %v1588 = vadd.f32 %v1564, %v1572
      %v1589 = vadd.f32 %v1566, %v1572
      %1591 = vset.pattern.permute.xlu0 0
      %1592 = vperm.xlu0 %1591, %v1574
      %v1593 = vpop.permute.xlu0 %1592
      %1596 = vset.pattern.permute.xlu0 0
      %1597 = vperm.xlu0 %1596, %v1575
      %v1598 = vpop.permute.xlu0 %1597
      %1601 = vset.pattern.permute.xlu0 0
      %1602 = vperm.xlu0 %1601, %v1576
      %v1603 = vpop.permute.xlu0 %1602
      %1606 = vset.pattern.permute.xlu0 0
      %1607 = vperm.xlu0 %1606, %v1577
      %v1608 = vpop.permute.xlu0 %1607
      %1611 = vset.pattern.permute.xlu0 0
      %1612 = vperm.xlu0 %1611, %v1578
      %v1613 = vpop.permute.xlu0 %1612
      %1616 = vset.pattern.permute.xlu0 0
      %1617 = vperm.xlu0 %1616, %v1579
      %v1618 = vpop.permute.xlu0 %1617
      %1621 = vset.pattern.permute.xlu0 0
      %1622 = vperm.xlu0 %1621, %v1580
      %v1623 = vpop.permute.xlu0 %1622
      %1626 = vset.pattern.permute.xlu0 0
      %1627 = vperm.xlu0 %1626, %v1581
      %v1628 = vpop.permute.xlu0 %1627
      %1631 = vset.pattern.permute.xlu0 0
      %1632 = vperm.xlu0 %1631, %v1582
      %v1633 = vpop.permute.xlu0 %1632
      %1636 = vset.pattern.permute.xlu0 0
      %1637 = vperm.xlu0 %1636, %v1583
      %v1638 = vpop.permute.xlu0 %1637
      %1641 = vset.pattern.permute.xlu0 0
      %1642 = vperm.xlu0 %1641, %v1584
      %v1643 = vpop.permute.xlu0 %1642
      %1646 = vset.pattern.permute.xlu0 0
      %1647 = vperm.xlu0 %1646, %v1585
      %v1648 = vpop.permute.xlu0 %1647
      %1651 = vset.pattern.permute.xlu0 0
      %1652 = vperm.xlu0 %1651, %v1586
      %v1653 = vpop.permute.xlu0 %1652
      %1656 = vset.pattern.permute.xlu0 0
      %1657 = vperm.xlu0 %1656, %v1587
      %v1658 = vpop.permute.xlu0 %1657
      %1661 = vset.pattern.permute.xlu0 0
      %1662 = vperm.xlu0 %1661, %v1588
      %v1663 = vpop.permute.xlu0 %1662
      %1666 = vset.pattern.permute.xlu0 0
      %1667 = vperm.xlu0 %1666, %v1589
      %v1668 = vpop.permute.xlu0 %1667
      %v1670 = vmul.f32 %v1593, %v429
      %v1671 = vmul.f32 %v1598, %v430
      %v1672 = vmul.f32 %v1603, %v431
      %v1673 = vmul.f32 %v1608, %v432
      %v1674 = vmul.f32 %v1613, %v433
      %v1675 = vmul.f32 %v1618, %v434
      %v1676 = vmul.f32 %v1623, %v435
      %v1677 = vmul.f32 %v1628, %v436
      %v1678 = vmul.f32 %v1633, %v437
      %v1679 = vmul.f32 %v1638, %v438
      %v1680 = vmul.f32 %v1643, %v439
      %v1681 = vmul.f32 %v1648, %v440
      %v1682 = vmul.f32 %v1653, %v441
      %v1683 = vmul.f32 %v1658, %v442
      %v1684 = vmul.f32 %v1663, %v443
      %v1685 = vmul.f32 %v1668, %v444
      %v1686 = vlaneseq
      %v1687 = vshrl.u32 %v1686, 7
      %v1688 = vadd.s32 %v1687, 8
      %v1689 = vld [vmem:[%s422] sm:$0x1]
      %v1690 = vld [vmem:[%s422 + $0x1] sm:$0x1]
      %v1691 = vld [vmem:[%s422 + $0x2] sm:$0x1]
      %v1692 = vld [vmem:[%s422 + $0x3] sm:$0x1]
      %v1693 = vld [vmem:[%s422 + $0x4] sm:$0x1]
      %v1694 = vld [vmem:[%s422 + $0x5] sm:$0x1]
      %v1695 = vld [vmem:[%s422 + $0x6] sm:$0x1]
      %v1696 = vld [vmem:[%s422 + $0x7] sm:$0x1]
      %v1697 = vlaneseq
      %v1698 = vshrl.u32 %v1697, 7
      %v1699 = vsub.s32 0, %v1698
      %v1700 = vrot.slane %v1689, %v1699
      %v1701 = vlaneseq
      %v1702 = vshrl.u32 %v1701, 7
      %v1703 = vsub.s32 0, %v1702
      %v1704 = vrot.slane %v1690, %v1703
      %v1705 = vlaneseq
      %v1706 = vshrl.u32 %v1705, 7
      %v1707 = vsub.s32 0, %v1706
      %v1708 = vrot.slane %v1691, %v1707
      %v1709 = vlaneseq
      %v1710 = vshrl.u32 %v1709, 7
      %v1711 = vsub.s32 0, %v1710
      %v1712 = vrot.slane %v1692, %v1711
      %v1713 = vlaneseq
      %v1714 = vshrl.u32 %v1713, 7
      %v1715 = vsub.s32 0, %v1714
      %v1716 = vrot.slane %v1693, %v1715
      %v1717 = vlaneseq
      %v1718 = vshrl.u32 %v1717, 7
      %v1719 = vsub.s32 0, %v1718
      %v1720 = vrot.slane %v1694, %v1719
      %v1721 = vlaneseq
      %v1722 = vshrl.u32 %v1721, 7
      %v1723 = vsub.s32 0, %v1722
      %v1724 = vrot.slane %v1695, %v1723
      %v1725 = vlaneseq
      %v1726 = vshrl.u32 %v1725, 7
      %v1727 = vsub.s32 0, %v1726
      %v1728 = vrot.slane %v1696, %v1727
      %1729 = vset.pattern.permute.xlu0 0
      %1730 = vperm.xlu0 %1729, %v1700
      %v1731 = vpop.permute.xlu0 %1730
      %1732 = vset.pattern.permute.xlu0 0
      %1733 = vperm.xlu0 %1732, %v1704
      %v1734 = vpop.permute.xlu0 %1733
      %1735 = vset.pattern.permute.xlu0 0
      %1736 = vperm.xlu0 %1735, %v1708
      %v1737 = vpop.permute.xlu0 %1736
      %1738 = vset.pattern.permute.xlu0 0
      %1739 = vperm.xlu0 %1738, %v1712
      %v1740 = vpop.permute.xlu0 %1739
      %1741 = vset.pattern.permute.xlu0 0
      %1742 = vperm.xlu0 %1741, %v1716
      %v1743 = vpop.permute.xlu0 %1742
      %1744 = vset.pattern.permute.xlu0 0
      %1745 = vperm.xlu0 %1744, %v1720
      %v1746 = vpop.permute.xlu0 %1745
      %1747 = vset.pattern.permute.xlu0 0
      %1748 = vperm.xlu0 %1747, %v1724
      %v1749 = vpop.permute.xlu0 %1748
      %1750 = vset.pattern.permute.xlu0 0
      %1751 = vperm.xlu0 %1750, %v1728
      %v1752 = vpop.permute.xlu0 %1751
      %vm1753 = vcmp.lt.s32.totalorder %v1687, %v1731
      %vm1754 = vcmp.lt.s32.totalorder %v1688, %v1731
      %vm1755 = vcmp.lt.s32.totalorder %v1687, %v1734
      %vm1756 = vcmp.lt.s32.totalorder %v1688, %v1734
      %vm1757 = vcmp.lt.s32.totalorder %v1687, %v1737
      %vm1758 = vcmp.lt.s32.totalorder %v1688, %v1737
      %vm1759 = vcmp.lt.s32.totalorder %v1687, %v1740
      %vm1760 = vcmp.lt.s32.totalorder %v1688, %v1740
      %vm1761 = vcmp.lt.s32.totalorder %v1687, %v1743
      %vm1762 = vcmp.lt.s32.totalorder %v1688, %v1743
      %vm1763 = vcmp.lt.s32.totalorder %v1687, %v1746
      %vm1764 = vcmp.lt.s32.totalorder %v1688, %v1746
      %vm1765 = vcmp.lt.s32.totalorder %v1687, %v1749
      %vm1766 = vcmp.lt.s32.totalorder %v1688, %v1749
      %vm1767 = vcmp.lt.s32.totalorder %v1687, %v1752
      %vm1768 = vcmp.lt.s32.totalorder %v1688, %v1752
      %v1769 = vsel %vm1753, %v1670, 0.0
      %v1770 = vsel %vm1754, %v1671, 0.0
      %v1771 = vsel %vm1755, %v1672, 0.0
      %v1772 = vsel %vm1756, %v1673, 0.0
      %v1773 = vsel %vm1757, %v1674, 0.0
      %v1774 = vsel %vm1758, %v1675, 0.0
      %v1775 = vsel %vm1759, %v1676, 0.0
      %v1776 = vsel %vm1760, %v1677, 0.0
      %v1777 = vsel %vm1761, %v1678, 0.0
      %v1778 = vsel %vm1762, %v1679, 0.0
      %v1779 = vsel %vm1763, %v1680, 0.0
      %v1780 = vsel %vm1764, %v1681, 0.0
      %v1781 = vsel %vm1765, %v1682, 0.0
      %v1782 = vsel %vm1766, %v1683, 0.0
      %v1783 = vsel %vm1767, %v1684, 0.0
      %v1784 = vsel %vm1768, %v1685, 0.0
      %v1785 = vsel %vm552, %v1769, 0.0
      %v1786 = vsel %vm552, %v1770, 0.0
      %v1787 = vadd.f32 %v1785, %v1786
      %v1788 = vrot.slane %v1787, 4
      %v1789 = vadd.f32 %v1787, %v1788
      %v1790 = vrot.slane %v1789, 2
      %v1791 = vadd.f32 %v1789, %v1790
      %v1792 = vrot.slane %v1791, 1
      %v1793 = vadd.f32 %v1791, %v1792
      %v1794 = vsel %vm552, %v1771, 0.0
      %v1795 = vsel %vm552, %v1772, 0.0
      %v1796 = vadd.f32 %v1794, %v1795
      %v1797 = vrot.slane %v1796, 4
      %v1798 = vadd.f32 %v1796, %v1797
      %v1799 = vrot.slane %v1798, 2
      %v1800 = vadd.f32 %v1798, %v1799
      %v1801 = vrot.slane %v1800, 1
      %v1802 = vadd.f32 %v1800, %v1801
      %v1803 = vsel %vm552, %v1773, 0.0
      %v1804 = vsel %vm552, %v1774, 0.0
      %v1805 = vadd.f32 %v1803, %v1804
      %v1806 = vrot.slane %v1805, 4
      %v1807 = vadd.f32 %v1805, %v1806
      %v1808 = vrot.slane %v1807, 2
      %v1809 = vadd.f32 %v1807, %v1808
      %v1810 = vrot.slane %v1809, 1
      %v1811 = vadd.f32 %v1809, %v1810
      %v1812 = vsel %vm552, %v1775, 0.0
      %v1813 = vsel %vm552, %v1776, 0.0
      %v1814 = vadd.f32 %v1812, %v1813
      %v1815 = vrot.slane %v1814, 4
      %v1816 = vadd.f32 %v1814, %v1815
      %v1817 = vrot.slane %v1816, 2
      %v1818 = vadd.f32 %v1816, %v1817
      %v1819 = vrot.slane %v1818, 1
      %v1820 = vadd.f32 %v1818, %v1819
      %v1821 = vsel %vm552, %v1777, 0.0
      %v1822 = vsel %vm552, %v1778, 0.0
      %v1823 = vadd.f32 %v1821, %v1822
      %v1824 = vrot.slane %v1823, 4
      %v1825 = vadd.f32 %v1823, %v1824
      %v1826 = vrot.slane %v1825, 2
      %v1827 = vadd.f32 %v1825, %v1826
      %v1828 = vrot.slane %v1827, 1
      %v1829 = vadd.f32 %v1827, %v1828
      %v1830 = vsel %vm552, %v1779, 0.0
      %v1831 = vsel %vm552, %v1780, 0.0
      %v1832 = vadd.f32 %v1830, %v1831
      %v1833 = vrot.slane %v1832, 4
      %v1834 = vadd.f32 %v1832, %v1833
      %v1835 = vrot.slane %v1834, 2
      %v1836 = vadd.f32 %v1834, %v1835
      %v1837 = vrot.slane %v1836, 1
      %v1838 = vadd.f32 %v1836, %v1837
      %v1839 = vsel %vm552, %v1781, 0.0
      %v1840 = vsel %vm552, %v1782, 0.0
      %v1841 = vadd.f32 %v1839, %v1840
      %v1842 = vrot.slane %v1841, 4
      %v1843 = vadd.f32 %v1841, %v1842
      %v1844 = vrot.slane %v1843, 2
      %v1845 = vadd.f32 %v1843, %v1844
      %v1846 = vrot.slane %v1845, 1
      %v1847 = vadd.f32 %v1845, %v1846
      %v1848 = vsel %vm552, %v1783, 0.0
      %v1849 = vsel %vm552, %v1784, 0.0
      %v1850 = vadd.f32 %v1848, %v1849
      %v1851 = vrot.slane %v1850, 4
      %v1852 = vadd.f32 %v1850, %v1851
      %v1853 = vrot.slane %v1852, 2
      %v1854 = vadd.f32 %v1852, %v1853
      %v1855 = vrot.slane %v1854, 1
      %v1856 = vadd.f32 %v1854, %v1855
      %vm1865 = vcmask 1041409
      %v1866 = vsel %vm1865, %v1802, %v1793
      %vm1867 = vcmask 1042434
      %v1868 = vsel %vm1867, %v1811, %v1866
      %vm1869 = vcmask 1043459
      %v1870 = vsel %vm1869, %v1820, %v1868
      %vm1871 = vcmask 1044484
      %v1872 = vsel %vm1871, %v1829, %v1870
      %vm1873 = vcmask 1045509
      %v1874 = vsel %vm1873, %v1838, %v1872
      %vm1875 = vcmask 1046534
      %v1876 = vsel %vm1875, %v1847, %v1874
      %vm1877 = vcmask 1047559
      %v1878 = vsel %vm1877, %v1856, %v1876
      %1880 = vst.msk [vmem:[%s427] sm:$0xff] %vm552, %v1878
      %p1881 = scmp.lt.s32.totalorder %s24, 1
      %s1882 = scalar_select %p1881, %s24, 1
      %s1883 = smul.addr %s1882, 8
      %s1884 = scalar_lea.vmem %s11, %s1883
      // Predicated region
      $region65: #{tpu_custom_call.1} parent=63 // pred_check
        %p1885 = pneg %p288
      $region66: #{tpu_custom_call.1} parent=63 // pred_check_branch
        %1887 = sbr.rel (%p1885) target = $region68
      $region67: #{tpu_custom_call.1} parent=63 // pred_region
        _
      $region68: #{tpu_custom_call.1} parent=63 // pred_fallthru
        _
    $region64: #{tpu_custom_call.1} parent=5 // pred_fallthru
      _
    %p1888 = scmp.le.s32.totalorder 2, %s19
    // Predicated region
    $region69: #{tpu_custom_call.1} parent=5 // pred_check
      %p1889 = pneg %p1888
    $region70: #{tpu_custom_call.1} parent=5 // pred_check_branch
      %1891 = sbr.rel (%p1889) target = $region72
    $region71: #{tpu_custom_call.1} parent=5 // pred_region
      %s1892 = ssub.s32 %s19, 2
      // Predicated region
      $region73: #{tpu_custom_call.1} parent=71 // pred_check
        %p1893 = pneg %p294
      $region74: #{tpu_custom_call.1} parent=71 // pred_check_branch
        %1895 = sbr.rel (%p1893) target = $region76
      $region75: #{tpu_custom_call.1} parent=71 // pred_region
        %p1896 = scmp.lt.s32.totalorder %s25, 1
        %s1897 = scalar_select %p1896, %s25, 1
        %s1898 = smul.addr %s1897, 8
        %s1899 = scalar_lea.vmem %s11, %s1898
      $region76: #{tpu_custom_call.1} parent=71 // pred_fallthru
        _
    $region72: #{tpu_custom_call.1} parent=5 // pred_fallthru
      _
  $region6: #{tpu_custom_call.1} parent=0 // loop_footer
    %s23 = sadd.s32 1, %s19
  $region7: #{tpu_custom_call.1} parent=0 // loop_footer_branch
    %18 = sbr.rel target = $region3
  $region8: #{tpu_custom_call.1} parent=0 // loop_exit
    _

</llo_original>
